<compile_context>
chip_gen: v7x
topology: tpu7x:2x2x1
jax: 0.10.0
libtpu: 0.0.40
codegen_flags: <defaults>
</compile_context>

<pallas_src>
import math
import numpy as np

import jax
import jax.numpy as jnp
from jax.experimental import pallas as pl
from jax.experimental.pallas import tpu as pltpu


# ---------------------------------------------------------------------------
# Host-side (numpy) construction of the basis constants (replaces sympy code).
# ---------------------------------------------------------------------------
def _sph_jn_np(x, n):
    """Spherical Bessel function of the first kind j_n(x), float64 numpy."""
    x = np.asarray(x, dtype=np.float64)
    j0 = np.sin(x) / x
    if n == 0:
        return j0
    j1 = np.sin(x) / (x * x) - np.cos(x) / x
    if n == 1:
        return j1
    jm2, jm1 = j0, j1
    for l in range(2, n + 1):
        jl = (2 * l - 1) / x * jm1 - jm2
        jm2, jm1 = jm1, jl
    return jm1


def _bisect(f, a, b, iters=120):
    fa = f(a)
    for _ in range(iters):
        m = 0.5 * (a + b)
        fm = f(m)
        if fa * fm <= 0.0:
            b = m
        else:
            a, fa = m, fm
    return 0.5 * (a + b)


def _sph_jn_zeros(n, k):
    """First k positive zeros of j_l for l = 0..n-1 (interlacing bracketing)."""
    zerosj = np.zeros((n, k), dtype=np.float64)
    zerosj[0] = np.arange(1, k + 1) * np.pi
    points = np.arange(1, k + n) * np.pi
    racines = np.zeros(k + n - 1, dtype=np.float64)
    for i in range(1, n):
        for j in range(k + n - 1 - i):
            racines[j] = _bisect(lambda r: _sph_jn_np(r, i), points[j], points[j + 1])
        points = racines.copy()
        zerosj[i, :k] = racines[:k]
    return zerosj


def _basis_constants(num_spherical, num_radial):
    zeros = _sph_jn_zeros(num_spherical, num_radial)          # z_{l,n}
    norm = np.zeros_like(zeros)                                # N_{l,n}
    for l in range(num_spherical):
        for n in range(num_radial):
            norm[l, n] = 1.0 / math.sqrt(0.5 * _sph_jn_np(zeros[l, n], l + 1) ** 2)
    sph_c = np.array(
        [math.sqrt((2 * l + 1) / (4.0 * math.pi)) for l in range(num_spherical)],
        dtype=np.float64,
    )
    return zeros, norm, sph_c


# ---------------------------------------------------------------------------
# Pallas kernel (lane-dense: triplets on the lane axis)
# ---------------------------------------------------------------------------
def _make_kernel(num_spherical, num_radial, envelope_exponent):
    ns, nr = num_spherical, num_radial
    nsnr = ns * nr
    p = envelope_exponent + 1
    a = -(p + 1) * (p + 2) / 2.0
    b = p * (p + 2) * 1.0
    c = -p * (p + 1) / 2.0

    def kernel(z_ref, n_ref, c_ref, d_ref, ang_ref, o_ref):
        d = d_ref[...]          # (1, TB)     scaled distance, gathered by idx_kj
        ang = ang_ref[...]      # (1, TB)     angle
        Z = z_ref[...]          # (nsnr, 1)   roots z_{l,n}, l-major / n-minor
        N = n_ref[...]          # (nsnr, 1)   normalizers N_{l,n}
        C = c_ref[...]          # (nsnr, 1)   sqrt((2l+1)/4pi), repeated per n

        # --- envelope u(d): one reciprocal, powers via multiplies ------------
        inv_d = pl.reciprocal(d, approx=False)
        x_pm1 = d
        for _ in range(p - 2):
            x_pm1 = x_pm1 * d                           # d^(p-1)
        x_p = x_pm1 * d                                 # d^p
        x_pp1 = x_p * d                                 # d^(p+1)
        env = (inv_d + a * x_pm1 + b * x_p + c * x_pp1) * (d < 1.0).astype(d.dtype)

        # per-row (l-major) column index; rows [l*nr, (l+1)*nr) belong to order l
        row_i = jax.lax.broadcasted_iota(jnp.int32, (nsnr, 1), 0)

        # --- spherical Bessel j_l(z_{l,n} d): one sin/cos/recip per tile -----
        t = Z * d                                       # (nsnr, TB)
        inv_t = pl.reciprocal(t, approx=False)
        s = jnp.sin(t)
        ct = jnp.cos(t)
        j0 = s * inv_t
        if ns == 1:
            j_sel = j0
        else:
            j1 = (s * inv_t - ct) * inv_t
            j_sel = jnp.where(row_i >= nr, j1, j0)      # rows with l >= 1 get j1
            j_m2, j_m1 = j0, j1
            for ll in range(2, ns):                     # upward recurrence
                j_ll = (2.0 * ll - 1.0) * inv_t * j_m1 - j_m2
                j_sel = jnp.where(row_i >= ll * nr, j_ll, j_sel)
                j_m2, j_m1 = j_m1, j_ll

        # --- zonal real sph. harmonics via Legendre recurrence on cos(angle) -
        x = jnp.cos(ang)                                # (1, TB)
        P0 = jnp.ones_like(x)
        if ns == 1:
            P_sel = P0
        else:
            P1 = x
            P_sel = jnp.where(row_i >= nr, P1, P0)      # (nsnr, TB)
            P_m2, P_m1 = P0, P1
            for ll in range(2, ns):
                P_ll = ((2.0 * ll - 1.0) * x * P_m1 - (ll - 1.0) * P_m2) * (1.0 / ll)
                P_sel = jnp.where(row_i >= ll * nr, P_ll, P_sel)
                P_m2, P_m1 = P_m1, P_ll

        # --- fused product, single full-tile (lane-dense, unmasked) store ----
        o_ref[...] = env * (N * j_sel) * (C * P_sel)    # (nsnr, TB)

    return kernel


class SphericalBasisLayerPallas:
    def __init__(self, num_spherical, num_radial, cutoff=5.0, envelope_exponent=5,
                 block_t=512):
        assert num_radial <= 64
        assert block_t % 128 == 0, "block_t must be a multiple of 128 lanes"
        self.num_spherical = num_spherical
        self.num_radial = num_radial
        self.cutoff = cutoff
        self.block_t = block_t
        self._p = envelope_exponent + 1

        zeros, norm, sph_c = _basis_constants(num_spherical, num_radial)
        self._zeros, self._norm, self._sph_c = zeros, norm, sph_c

        nsnr = num_spherical * num_radial
        # l-major / n-minor per-output-column constants as (ns*nr, 1) f32 columns,
        # passed as kernel inputs (fixes the captured-constants trace error).
        self._z_col = jnp.asarray(zeros.reshape(nsnr, 1), jnp.float32)
        self._n_col = jnp.asarray(norm.reshape(nsnr, 1), jnp.float32)
        self._c_col = jnp.asarray(
            np.repeat(sph_c, num_radial).reshape(nsnr, 1), jnp.float32)

        self._kernel = _make_kernel(num_spherical, num_radial, envelope_exponent)

    def __call__(self, dist, angle, idx_kj):
        ns, nr = self.num_spherical, self.num_radial
        nsnr = ns * nr
        T = angle.shape[0]
        TB = self.block_t
        T_pad = ((T + TB - 1) // TB) * TB

        # Glue: scale + data-dependent gather of the per-triplet distance.
        # TODO(synk): for very large T, move this gather into the kernel via
        # PrefetchScalarGridSpec + pl.Element row-gather to skip the extra HBM trip.
        d_scaled = dist.astype(jnp.float32) * (1.0 / self.cutoff)
        d_g = jnp.take(d_scaled, idx_kj, axis=0)          # (T,)
        ang = angle.astype(jnp.float32)                    # (T,)

        pad = T_pad - T
        if pad:
            # pad with a safe value (d=0.5) so padded lanes never produce inf/nan
            d_g = jnp.concatenate([d_g, jnp.full((pad,), 0.5, jnp.float32)])
            ang = jnp.concatenate([ang, jnp.full((pad,), 0.5, jnp.float32)])

        d_row = d_g.reshape(1, T_pad)
        ang_row = ang.reshape(1, T_pad)

        out_t = pl.pallas_call(
            self._kernel,
            out_shape=jax.ShapeDtypeStruct((nsnr, T_pad), jnp.float32),
            grid=(T_pad // TB,),
            in_specs=[
                pl.BlockSpec((nsnr, 1), lambda i: (0, 0)),   # z_{l,n}
                pl.BlockSpec((nsnr, 1), lambda i: (0, 0)),   # N_{l,n}
                pl.BlockSpec((nsnr, 1), lambda i: (0, 0)),   # sph. harm. coeffs
                pl.BlockSpec((1, TB), lambda i: (0, i)),     # gathered d
                pl.BlockSpec((1, TB), lambda i: (0, i)),     # angle
            ],
            out_specs=pl.BlockSpec((nsnr, TB), lambda i: (0, i)),
            compiler_params=pltpu.CompilerParams(
                dimension_semantics=("parallel",)),
        )(self._z_col, self._n_col, self._c_col, d_row, ang_row)

        # Wrapper-side layout plumbing back to torch's (T, ns*nr) order.
        return out_t.T[:T]

    # Pure-JAX reference with identical math (for verification).
    def reference(self, dist, angle, idx_kj):
        ns, nr = self.num_spherical, self.num_radial
        p = self._p
        a = -(p + 1) * (p + 2) / 2.0
        b = p * (p + 2) * 1.0
        c = -p * (p + 1) / 2.0
        d = dist.astype(jnp.float32) / self.cutoff               # (E,)
        env = (1.0 / d + a * d ** (p - 1) + b * d ** p + c * d ** (p + 1)) \
              * (d < 1.0).astype(d.dtype)

        rbf_cols = []
        for l in range(ns):
            for n in range(nr):
                t = d * np.float32(self._zeros[l, n])
                s, ct = jnp.sin(t), jnp.cos(t)
                j0 = s / t
                if l == 0:
                    jl = j0
                else:
                    j1 = s / (t * t) - ct / t
                    jm2, jm1, jl = j0, j1, j1
                    for ll in range(2, l + 1):
                        jl = (2 * ll - 1) / t * jm1 - jm2
                        jm2, jm1 = jm1, jl
                rbf_cols.append(np.float32(self._norm[l, n]) * jl)
        rbf = jnp.stack(rbf_cols, axis=1) * env[:, None]         # (E, ns*nr)

        x = jnp.cos(angle.astype(jnp.float32))
        P = [jnp.ones_like(x), x]
        for l in range(2, ns):
            P.append(((2 * l - 1) * x * P[l - 1] - (l - 1) * P[l - 2]) / l)
        cbf = jnp.stack(
            [np.float32(self._sph_c[l]) * P[l] for l in range(ns)], axis=1)  # (T, ns)

        out = (rbf[idx_kj].reshape(-1, ns, nr) * cbf.reshape(-1, ns, 1))
        return out.reshape(-1, ns * nr)


if __name__ == "__main__":
    num_spherical, num_radial = 3, 4
    cutoff, envelope_exponent = 5.0, 5
    E, T = 64, 48  # edges, triplets

    key = jax.random.PRNGKey(0)
    k1, k2, k3 = jax.random.split(key, 3)
    dist = jax.random.uniform(k1, (E,), jnp.float32, minval=0.5, maxval=4.5)
    angle = jax.random.uniform(k2, (T,), jnp.float32, minval=0.0, maxval=math.pi)
    idx_kj = jax.random.randint(k3, (T,), 0, E, dtype=jnp.int32)

    layer = SphericalBasisLayerPallas(num_spherical, num_radial,
                                      cutoff=cutoff,
                                      envelope_exponent=envelope_exponent)

    out = layer(dist, angle, idx_kj)
    out = jax.block_until_ready(out)

    ref = jax.block_until_ready(layer.reference(dist, angle, idx_kj))
    assert out.shape == (T, num_spherical * num_radial)
    np.testing.assert_allclose(np.asarray(out), np.asarray(ref),
                               rtol=1e-4, atol=1e-5)

    print("KERNEL_OK")
</pallas_src>

<mosaic_0001>
module attributes {stable_mosaic.version = 11 : i64} {
  func.func @kernel(%arg0: i32, %arg1: memref<12x1xf32, #tpu.memory_space<vmem>>, %arg2: memref<12x1xf32, #tpu.memory_space<vmem>>, %arg3: memref<12x1xf32, #tpu.memory_space<vmem>>, %arg4: memref<1x512xf32, #tpu.memory_space<vmem>>, %arg5: memref<1x512xf32, #tpu.memory_space<vmem>>, %arg6: memref<12x512xf32, #tpu.memory_space<vmem>>) attributes {dimension_semantics = [#tpu.dimension_semantics<parallel>], iteration_bounds = array<i64: 1>, scalar_prefetch = 0 : i64, scratch_operands = 0 : i64, tpu.core_type = #tpu.core_type<tc>, window_params = [{pipeline_mode = #tpu.pipeline_mode<synchronous>, transform_indices = @transform_0, window_bounds = array<i64: 12, 1>}, {pipeline_mode = #tpu.pipeline_mode<synchronous>, transform_indices = @transform_1, window_bounds = array<i64: 12, 1>}, {pipeline_mode = #tpu.pipeline_mode<synchronous>, transform_indices = @transform_2, window_bounds = array<i64: 12, 1>}, {transform_indices = @transform_3, window_bounds = array<i64: 1, 512>}, {transform_indices = @transform_4, window_bounds = array<i64: 1, 512>}, {transform_indices = @transform_5, window_bounds = array<i64: 12, 512>}]} {
    %c0 = arith.constant 0 : index
    %c0_0 = arith.constant 0 : index
    %0 = vector.load %arg4[%c0, %c0_0] : memref<1x512xf32, #tpu.memory_space<vmem>>, vector<1x512xf32>
    %c0_1 = arith.constant 0 : index
    %c0_2 = arith.constant 0 : index
    %1 = vector.load %arg5[%c0_1, %c0_2] : memref<1x512xf32, #tpu.memory_space<vmem>>, vector<1x512xf32>
    %c0_3 = arith.constant 0 : index
    %c0_4 = arith.constant 0 : index
    %2 = vector.load %arg1[%c0_3, %c0_4] : memref<12x1xf32, #tpu.memory_space<vmem>>, vector<12x1xf32>
    %c0_5 = arith.constant 0 : index
    %c0_6 = arith.constant 0 : index
    %3 = vector.load %arg2[%c0_5, %c0_6] : memref<12x1xf32, #tpu.memory_space<vmem>>, vector<12x1xf32>
    %c0_7 = arith.constant 0 : index
    %c0_8 = arith.constant 0 : index
    %4 = vector.load %arg3[%c0_7, %c0_8] : memref<12x1xf32, #tpu.memory_space<vmem>>, vector<12x1xf32>
    %5 = tpu.reciprocal %0 : vector<1x512xf32> -> vector<1x512xf32>
    %6 = arith.mulf %0, %0 : vector<1x512xf32>
    %7 = arith.mulf %6, %0 : vector<1x512xf32>
    %8 = arith.mulf %7, %0 : vector<1x512xf32>
    %9 = arith.mulf %8, %0 : vector<1x512xf32>
    %10 = arith.mulf %9, %0 : vector<1x512xf32>
    %11 = arith.mulf %10, %0 : vector<1x512xf32>
    %cst = arith.constant -2.800000e+01 : f32
    %12 = vector.broadcast %cst : f32 to vector<1x512xf32>
    %13 = arith.mulf %12, %9 : vector<1x512xf32>
    %14 = arith.addf %5, %13 : vector<1x512xf32>
    %cst_9 = arith.constant 4.800000e+01 : f32
    %15 = vector.broadcast %cst_9 : f32 to vector<1x512xf32>
    %16 = arith.mulf %15, %10 : vector<1x512xf32>
    %17 = arith.addf %14, %16 : vector<1x512xf32>
    %cst_10 = arith.constant -2.100000e+01 : f32
    %18 = vector.broadcast %cst_10 : f32 to vector<1x512xf32>
    %19 = arith.mulf %18, %11 : vector<1x512xf32>
    %20 = arith.addf %17, %19 : vector<1x512xf32>
    %cst_11 = arith.constant 1.000000e+00 : f32
    %21 = vector.broadcast %cst_11 : f32 to vector<1x512xf32>
    %22 = arith.cmpf olt, %0, %21 : vector<1x512xf32>
    %23 = arith.extui %22 : vector<1x512xi1> to vector<1x512xi32>
    %24 = arith.sitofp %23 : vector<1x512xi32> to vector<1x512xf32>
    %25 = arith.mulf %20, %24 : vector<1x512xf32>
    %26 = tpu.iota {dimensions = array<i32: 0>} : vector<12x1xi32>
    %27 = vector.broadcast %2 : vector<12x1xf32> to vector<12x512xf32>
    %28 = vector.broadcast %0 : vector<1x512xf32> to vector<12x512xf32>
    %29 = arith.mulf %27, %28 : vector<12x512xf32>
    %30 = tpu.reciprocal %29 : vector<12x512xf32> -> vector<12x512xf32>
    %31 = math.sin %29 : vector<12x512xf32>
    %32 = math.cos %29 : vector<12x512xf32>
    %33 = arith.mulf %31, %30 : vector<12x512xf32>
    %34 = arith.mulf %31, %30 : vector<12x512xf32>
    %35 = arith.subf %34, %32 : vector<12x512xf32>
    %36 = arith.mulf %35, %30 : vector<12x512xf32>
    %c4_i32 = arith.constant 4 : i32
    %37 = vector.broadcast %c4_i32 : i32 to vector<12x1xi32>
    %38 = arith.cmpi sge, %26, %37 : vector<12x1xi32>
    %39 = vector.shape_cast %38 : vector<12x1xi1> to vector<12x1xi1>
    %40 = vector.broadcast %39 : vector<12x1xi1> to vector<12x512xi1>
    %41 = arith.select %40, %36, %33 : vector<12x512xi1>, vector<12x512xf32>
    %cst_12 = arith.constant 3.000000e+00 : f32
    %42 = vector.broadcast %cst_12 : f32 to vector<12x512xf32>
    %43 = arith.mulf %42, %30 : vector<12x512xf32>
    %44 = arith.mulf %43, %36 : vector<12x512xf32>
    %45 = arith.subf %44, %33 : vector<12x512xf32>
    %c8_i32 = arith.constant 8 : i32
    %46 = vector.broadcast %c8_i32 : i32 to vector<12x1xi32>
    %47 = arith.cmpi sge, %26, %46 : vector<12x1xi32>
    %48 = vector.shape_cast %47 : vector<12x1xi1> to vector<12x1xi1>
    %49 = vector.broadcast %48 : vector<12x1xi1> to vector<12x512xi1>
    %50 = arith.select %49, %45, %41 : vector<12x512xi1>, vector<12x512xf32>
    %51 = math.cos %1 : vector<1x512xf32>
    %cst_13 = arith.constant 1.000000e+00 : f32
    %52 = vector.broadcast %cst_13 : f32 to vector<1x512xf32>
    %c4_i32_14 = arith.constant 4 : i32
    %53 = vector.broadcast %c4_i32_14 : i32 to vector<12x1xi32>
    %54 = arith.cmpi sge, %26, %53 : vector<12x1xi32>
    %55 = vector.shape_cast %54 : vector<12x1xi1> to vector<12x1xi1>
    %56 = vector.broadcast %55 : vector<12x1xi1> to vector<12x512xi1>
    %57 = vector.shape_cast %51 : vector<1x512xf32> to vector<1x512xf32>
    %58 = vector.broadcast %57 : vector<1x512xf32> to vector<12x512xf32>
    %59 = vector.shape_cast %52 : vector<1x512xf32> to vector<1x512xf32>
    %60 = vector.broadcast %59 : vector<1x512xf32> to vector<12x512xf32>
    %61 = arith.select %56, %58, %60 : vector<12x512xi1>, vector<12x512xf32>
    %cst_15 = arith.constant 3.000000e+00 : f32
    %62 = vector.broadcast %cst_15 : f32 to vector<1x512xf32>
    %63 = arith.mulf %62, %51 : vector<1x512xf32>
    %64 = arith.mulf %63, %51 : vector<1x512xf32>
    %cst_16 = arith.constant 1.000000e+00 : f32
    %65 = vector.broadcast %cst_16 : f32 to vector<1x512xf32>
    %66 = arith.mulf %65, %52 : vector<1x512xf32>
    %67 = arith.subf %64, %66 : vector<1x512xf32>
    %cst_17 = arith.constant 5.000000e-01 : f32
    %68 = vector.broadcast %cst_17 : f32 to vector<1x512xf32>
    %69 = arith.mulf %67, %68 : vector<1x512xf32>
    %c8_i32_18 = arith.constant 8 : i32
    %70 = vector.broadcast %c8_i32_18 : i32 to vector<12x1xi32>
    %71 = arith.cmpi sge, %26, %70 : vector<12x1xi32>
    %72 = vector.shape_cast %71 : vector<12x1xi1> to vector<12x1xi1>
    %73 = vector.broadcast %72 : vector<12x1xi1> to vector<12x512xi1>
    %74 = vector.shape_cast %69 : vector<1x512xf32> to vector<1x512xf32>
    %75 = vector.broadcast %74 : vector<1x512xf32> to vector<12x512xf32>
    %76 = arith.select %73, %75, %61 : vector<12x512xi1>, vector<12x512xf32>
    %77 = vector.broadcast %3 : vector<12x1xf32> to vector<12x512xf32>
    %78 = arith.mulf %77, %50 : vector<12x512xf32>
    %79 = vector.broadcast %25 : vector<1x512xf32> to vector<12x512xf32>
    %80 = arith.mulf %79, %78 : vector<12x512xf32>
    %81 = vector.broadcast %4 : vector<12x1xf32> to vector<12x512xf32>
    %82 = arith.mulf %81, %76 : vector<12x512xf32>
    %83 = arith.mulf %80, %82 : vector<12x512xf32>
    %c0_19 = arith.constant 0 : index
    %c0_20 = arith.constant 0 : index
    %84 = vector.load %arg6[%c0_19, %c0_20] : memref<12x512xf32, #tpu.memory_space<vmem>>, vector<12x512xf32>
    tpu.vector_store %arg6[%c0_19, %c0_20], %83 {strides = array<i32>} : memref<12x512xf32, #tpu.memory_space<vmem>>, vector<12x512xf32>,
    return
  }
  func.func @transform_0(%arg0: i32) -> (i32, i32) {
    %c0_i32 = arith.constant 0 : i32
    %c0_i32_0 = arith.constant 0 : i32
    %c0_i32_1 = arith.constant 0 : i32
    return %c0_i32, %c0_i32_0 : i32, i32
  }
  func.func @transform_1(%arg0: i32) -> (i32, i32) {
    %c0_i32 = arith.constant 0 : i32
    %c0_i32_0 = arith.constant 0 : i32
    %c0_i32_1 = arith.constant 0 : i32
    return %c0_i32, %c0_i32_0 : i32, i32
  }
  func.func @transform_2(%arg0: i32) -> (i32, i32) {
    %c0_i32 = arith.constant 0 : i32
    %c0_i32_0 = arith.constant 0 : i32
    %c0_i32_1 = arith.constant 0 : i32
    return %c0_i32, %c0_i32_0 : i32, i32
  }
  func.func @transform_3(%arg0: i32) -> (i32, i32) {
    %c0_i32 = arith.constant 0 : i32
    %c0_i32_0 = arith.constant 0 : i32
    return %c0_i32, %arg0 : i32, i32
  }
  func.func @transform_4(%arg0: i32) -> (i32, i32) {
    %c0_i32 = arith.constant 0 : i32
    %c0_i32_0 = arith.constant 0 : i32
    return %c0_i32, %arg0 : i32, i32
  }
  func.func @transform_5(%arg0: i32) -> (i32, i32) {
    %c0_i32 = arith.constant 0 : i32
    %c0_i32_0 = arith.constant 0 : i32
    return %c0_i32, %arg0 : i32, i32
  }
}

</mosaic_0001>

<llo_original>
// kernel: tpu_custom_call.1
$region0: #{tpu_custom_call.1}
  #allocation0 [shape = 'u32[]', space=smem, size = 0x4, offset = 0x4, fixed_abs, tag = 'smem constant byte address 0x4 - core index']
  #allocation1 [shape = 'u32[144,128]{1,0:T(1,128)}', space=vmem, size = 0x12000, scoped, tag = 'internal scratch']
  %s0 = inlined_call_operand.vmem [shape: f32[12,1], index: 0, kind: input, shape index: {}]
  %s1 = inlined_call_operand.vmem [shape: f32[12,1], index: 1, kind: input, shape index: {}]
  %s2 = inlined_call_operand.vmem [shape: f32[12,1], index: 2, kind: input, shape index: {}]
  %s3 = inlined_call_operand.vmem [shape: f32[1,512], index: 3, kind: input, shape index: {}]
  %s4 = inlined_call_operand.vmem [shape: f32[1,512], index: 4, kind: input, shape index: {}]
  %s5 = inlined_call_operand.hbm [shape: f32[12,512], index: 5, kind: output, shape index: {}]
  %s6 = sld [smem:[#allocation0]]
  $region30: #{tpu_custom_call.1} parent=0
    _
  %s8 = ssub.s32 1, %s6
  %s9 = scalar_select 0, %s8, %s6
  $region1: #{tpu_custom_call.1} parent=0
    #allocation2 [shape = 'u8[32768]{0}', space=vmem, size = 0x8000, scoped, tag = 'output window, operand 0, single buffered']
    #allocation3 [shape = 's32[1]{0}', space=sflag, size = 0x4, scoped, tag = 'scoped memory for tpu_custom_call.1']
    %10 = vsyncpa [#allocation3], 0
    // Predicated region
    $region2: #{tpu_custom_call.1} parent=1 // pred_check
      _
    $region3: #{tpu_custom_call.1} parent=1 // pred_check_branch
      %12 = sbr.rel (0) target = $region5
    $region4: #{tpu_custom_call.1} parent=1 // pred_region
      _
    $region5: #{tpu_custom_call.1} parent=1 // pred_fallthru
      _
    // Predicated region
    $region6: #{tpu_custom_call.1} parent=1 // pred_check
      _
    $region7: #{tpu_custom_call.1} parent=1 // pred_check_branch
      %14 = sbr.rel (0) target = $region9
    $region8: #{tpu_custom_call.1} parent=1 // pred_region
      _
    $region9: #{tpu_custom_call.1} parent=1 // pred_fallthru
      _
    // Predicated region
    $region10: #{tpu_custom_call.1} parent=1 // pred_check
      _
    $region11: #{tpu_custom_call.1} parent=1 // pred_check_branch
      %16 = sbr.rel (0) target = $region13
    $region12: #{tpu_custom_call.1} parent=1 // pred_region
      _
    $region13: #{tpu_custom_call.1} parent=1 // pred_fallthru
      _
    // Predicated region
    $region14: #{tpu_custom_call.1} parent=1 // pred_check
      _
    $region15: #{tpu_custom_call.1} parent=1 // pred_check_branch
      %18 = sbr.rel (0) target = $region17
    $region16: #{tpu_custom_call.1} parent=1 // pred_region
      _
    $region17: #{tpu_custom_call.1} parent=1 // pred_fallthru
      _
    // Predicated region
    $region18: #{tpu_custom_call.1} parent=1 // pred_check
      _
    $region19: #{tpu_custom_call.1} parent=1 // pred_check_branch
      %20 = sbr.rel (0) target = $region21
    $region20: #{tpu_custom_call.1} parent=1 // pred_region
      _
    $region21: #{tpu_custom_call.1} parent=1 // pred_fallthru
      _
    %v21 = vld [vmem:[%s3] sm:$0xf]
    %v22 = vld [vmem:[%s4] sm:$0xf]
    %v23 = vld [vmem:[%s0] sm:$0xff]
    %v24 = vld [vmem:[%s0 + $0x8] sm:$0xf]
    %v25 = vld [vmem:[%s1] sm:$0xff]
    %v26 = vld [vmem:[%s1 + $0x8] sm:$0xf]
    %v27 = vld [vmem:[%s2] sm:$0xff]
    %v28 = vld [vmem:[%s2 + $0x8] sm:$0xf]
    %v29 = vrcp.pop %v21
    %v30 = vmul.f32 %v21, %v21
    %v31 = vmul.f32 %v30, %v21
    %v32 = vmul.f32 %v31, %v21
    %v33 = vmul.f32 %v32, %v21
    %v34 = vmul.f32 %v33, %v21
    %v35 = vmul.f32 %v34, %v21
    %v36 = vmul.f32 %v33, -28.0
    %v37 = vadd.f32 %v29, %v36
    %v38 = vmul.f32 %v34, 48.0
    %v39 = vadd.f32 %v37, %v38
    %v40 = vmul.f32 %v35, -21.0
    %v41 = vadd.f32 %v39, %v40
    %vm42 = vcmp.lt.f32.partialorder %v21, 1.0
    %v43 = vsel %vm42, 1, 0
    %v44 = vcvt.s32.f32 %v43
    %v45 = vmul.f32 %v41, %v44
    %v46 = vlaneseq
    %v47 = vshrl.u32 %v46, 7
    %v48 = vadd.s32 %v47, 8
    %50 = vset.pattern.permute.xlu0 0
    %51 = vperm.xlu0 %50, %v23
    %v52 = vpop.permute.xlu0 %51
    %55 = vset.pattern.permute.xlu0 0
    %56 = vperm.xlu0 %55, %v24
    %v57 = vpop.permute.xlu0 %56
    %v60 = vlaneseq
    %v61 = vshrl.u32 %v60, 7
    %v62 = vsub.s32 0, %v61
    %v63 = vrot.slane %v21, %v62
    %v64 = vlaneseq
    %v65 = vshrl.u32 %v64, 7
    %v66 = vsub.s32 1, %v65
    %v67 = vrot.slane %v21, %v66
    %v68 = vlaneseq
    %v69 = vshrl.u32 %v68, 7
    %v70 = vsub.s32 2, %v69
    %v71 = vrot.slane %v21, %v70
    %v72 = vlaneseq
    %v73 = vshrl.u32 %v72, 7
    %v74 = vsub.s32 3, %v73
    %v75 = vrot.slane %v21, %v74
    %v80 = vmul.f32 %v52, %v63
    %v81 = vmul.f32 %v52, %v67
    %v82 = vmul.f32 %v52, %v71
    %v83 = vmul.f32 %v52, %v75
    %v84 = vmul.f32 %v57, %v63
    %v85 = vmul.f32 %v57, %v67
    %v86 = vmul.f32 %v57, %v71
    %v87 = vmul.f32 %v57, %v75
    %v88 = vrcp.pop %v80
    %v89 = vrcp.pop %v81
    %v90 = vrcp.pop %v82
    %v91 = vrcp.pop %v83
    %v92 = vrcp.pop %v84
    %v93 = vrcp.pop %v85
    %v94 = vrcp.pop %v86
    %v95 = vrcp.pop %v87
    %v96 = vand.u32 2147483647, %v80
    %vm97 = vcmp.le.f32.partialorder %v96, 0.7853982
    %vm98 = vcmp.lt.s32.totalorder %v80, 0
    %v99 = vand.u32 %v80, 2139095040
    %v100 = vshrl.u32 %v99, 23
    %v101 = vsub.s32 %v100, 127
    %v102 = vand.u32 2147483647, %v80
    %v103 = vand.u32 %v102, 8388607
    %v104 = vor.u32 %v103, 8388608
    %v105 = vsub.s32 0, %v104
    %v106 = vadd.s32 %v101, 1
    %vm107 = vcmp.gt.s32.totalorder %v106, 0
    %v108 = vsel %vm107, %v106, 0
    %v109 = vshrl.u32 %v108, 5
    %v110 = vand.u32 %v108, 31
    %v111 = vsub.s32 32, %v110
    %v112 = vshrl.u32 683565275, %v111
    %v113 = vshll.u32 683565275, %v110
    %v114 = vshrl.u32 2475754826, %v111
    %v115 = vor.u32 %v113, %v114
    %v116 = vshll.u32 2475754826, %v110
    %v117 = vshrl.u32 2131351028, %v111
    %v118 = vor.u32 %v116, %v117
    %v119 = vshll.u32 2131351028, %v110
    %v120 = vshrl.u32 2102212464, %v111
    %v121 = vor.u32 %v119, %v120
    %v122 = vshll.u32 2102212464, %v110
    %v123 = vshrl.u32 920167782, %v111
    %v124 = vor.u32 %v122, %v123
    %v125 = vshll.u32 920167782, %v110
    %v126 = vshrl.u32 1326507024, %v111
    %v127 = vor.u32 %v125, %v126
    %vm128 = vcmp.lt.s32.totalorder %v109, 1
    %vm129 = vcmp.lt.s32.totalorder %v109, 2
    %vm130 = vcmp.lt.s32.totalorder %v109, 3
    %vm131 = vcmp.lt.s32.totalorder %v109, 4
    %v132 = vsel %vm128, %v112, %v115
    %v133 = vsel %vm131, %v121, 2102212464
    %v134 = vsel %vm130, %v118, %v133
    %v135 = vsel %vm129, %v132, %v134
    %v136 = vsel %vm128, %v115, %v118
    %v137 = vsel %vm131, %v124, 920167782
    %v138 = vsel %vm130, %v121, %v137
    %v139 = vsel %vm129, %v136, %v138
    %v140 = vsel %vm128, %v118, %v121
    %v141 = vsel %vm131, %v127, 1326507024
    %v142 = vsel %vm130, %v124, %v141
    %v143 = vsel %vm129, %v140, %v142
    %v144 = vshll.u32 %v104, 8
    %v145 = vmul.u32.u64.compose %v144, %v143
    %v146 = vextract.low.u32 %v145
    %v147 = vextract.high.u32 %v145
    %v148 = vmul.u32.u64.compose %v144, %v139
    %v149 = vextract.low.u32 %v148
    %v150 = vextract.high.u32 %v148
    %v151 = vmul.u32 %v144, %v135
    %v152 = vadd.s32 %v147, %v149
    %vm153 = vc.u32 %v147, %v149
    %v154 = vadd.s32 %v150, 1
    %v155 = vsel %vm153, %v154, %v150
    %v156 = vadd.s32 %v151, %v155
    %v157 = vadd.s32 %v156, 536870912
    %v158 = vshrl.u32 %v157, 30
    %v159 = vshll.u32 %v158, 30
    %v160 = vsub.s32 %v156, %v159
    %vm161 = vcmp.lt.s32.totalorder %v160, 0
    %v162 = vsub.s32 0, %v160
    %v163 = vsel %vm161, %v162, %v160
    %v164 = vclz %v163
    %v165 = vsub.s32 %v164, 2
    %vm166 = vcmp.gt.s32.totalorder 0, %v165
    %v167 = vsel %vm166, 0, %v165
    %v168 = vsub.s32 32, %v167
    %v169 = vshll.u32 %v160, %v167
    %v170 = vshrl.u32 %v152, %v168
    %v171 = vor.u32 %v169, %v170
    %v172 = vsub.s32 4294967266, %v167
    %v173 = vadd.s32 %v172, 127
    %v174 = vshll.u32 %v173, 23
    %v175 = vor.u32 4788187, %v174
    %v176 = vand.u32 2147483647, %v175
    %v178 = vcvt.s32.f32 %v171
    %v179 = vmul.f32 %v178, %v176
    %v180 = vxor.u32 %v179, 2147483648
    %v181 = vsel %vm98, %v180, %v179
    %v182 = vsub.s32 4, %v158
    %v183 = vsel %vm98, %v182, %v158
    %v184 = vsel %vm97, %v80, %v181
    %v185 = vsel %vm97, 0, %v183
    %v186 = vcosq.f32.pop %v184
    %v187 = vsinq.f32.pop %v184
    %vm188 = vweird.f32 %v80
    %v189 = vadd.s32 %v185, 3
    %v190 = vand.u32 %v189, 3
    %vm191 = vcmp.lt.s32.totalorder %v190, 2
    %vm192 = vcmp.eq.s32.totalorder %v190, 0
    %v193 = vxor.u32 %v187, 2147483648
    %v194 = vsel %vm192, %v186, %v193
    %vm195 = vcmp.eq.s32.totalorder %v190, 2
    %v196 = vxor.u32 %v186, 2147483648
    %v197 = vsel %vm195, %v196, %v187
    %v198 = vsel %vm191, %v194, %v197
    %v199 = vsel %vm188, nan, %v198
    %v200 = vand.u32 2147483647, %v81
    %vm201 = vcmp.le.f32.partialorder %v200, 0.7853982
    %vm202 = vcmp.lt.s32.totalorder %v81, 0
    %v203 = vand.u32 %v81, 2139095040
    %v204 = vshrl.u32 %v203, 23
    %v205 = vsub.s32 %v204, 127
    %v206 = vand.u32 2147483647, %v81
    %v207 = vand.u32 %v206, 8388607
    %v208 = vor.u32 %v207, 8388608
    %v209 = vsub.s32 0, %v208
    %v210 = vadd.s32 %v205, 1
    %vm211 = vcmp.gt.s32.totalorder %v210, 0
    %v212 = vsel %vm211, %v210, 0
    %v213 = vshrl.u32 %v212, 5
    %v214 = vand.u32 %v212, 31
    %v215 = vsub.s32 32, %v214
    %v216 = vshrl.u32 683565275, %v215
    %v217 = vshll.u32 683565275, %v214
    %v218 = vshrl.u32 2475754826, %v215
    %v219 = vor.u32 %v217, %v218
    %v220 = vshll.u32 2475754826, %v214
    %v221 = vshrl.u32 2131351028, %v215
    %v222 = vor.u32 %v220, %v221
    %v223 = vshll.u32 2131351028, %v214
    %v224 = vshrl.u32 2102212464, %v215
    %v225 = vor.u32 %v223, %v224
    %v226 = vshll.u32 2102212464, %v214
    %v227 = vshrl.u32 920167782, %v215
    %v228 = vor.u32 %v226, %v227
    %v229 = vshll.u32 920167782, %v214
    %v230 = vshrl.u32 1326507024, %v215
    %v231 = vor.u32 %v229, %v230
    %vm232 = vcmp.lt.s32.totalorder %v213, 1
    %vm233 = vcmp.lt.s32.totalorder %v213, 2
    %vm234 = vcmp.lt.s32.totalorder %v213, 3
    %vm235 = vcmp.lt.s32.totalorder %v213, 4
    %v236 = vsel %vm232, %v216, %v219
    %v237 = vsel %vm235, %v225, 2102212464
    %v238 = vsel %vm234, %v222, %v237
    %v239 = vsel %vm233, %v236, %v238
    %v240 = vsel %vm232, %v219, %v222
    %v241 = vsel %vm235, %v228, 920167782
    %v242 = vsel %vm234, %v225, %v241
    %v243 = vsel %vm233, %v240, %v242
    %v244 = vsel %vm232, %v222, %v225
    %v245 = vsel %vm235, %v231, 1326507024
    %v246 = vsel %vm234, %v228, %v245
    %v247 = vsel %vm233, %v244, %v246
    %v248 = vshll.u32 %v208, 8
    %v249 = vmul.u32.u64.compose %v248, %v247
    %v250 = vextract.low.u32 %v249
    %v251 = vextract.high.u32 %v249
    %v252 = vmul.u32.u64.compose %v248, %v243
    %v253 = vextract.low.u32 %v252
    %v254 = vextract.high.u32 %v252
    %v255 = vmul.u32 %v248, %v239
    %v256 = vadd.s32 %v251, %v253
    %vm257 = vc.u32 %v251, %v253
    %v258 = vadd.s32 %v254, 1
    %v259 = vsel %vm257, %v258, %v254
    %v260 = vadd.s32 %v255, %v259
    %v261 = vadd.s32 %v260, 536870912
    %v262 = vshrl.u32 %v261, 30
    %v263 = vshll.u32 %v262, 30
    %v264 = vsub.s32 %v260, %v263
    %vm265 = vcmp.lt.s32.totalorder %v264, 0
    %v266 = vsub.s32 0, %v264
    %v267 = vsel %vm265, %v266, %v264
    %v268 = vclz %v267
    %v269 = vsub.s32 %v268, 2
    %vm270 = vcmp.gt.s32.totalorder 0, %v269
    %v271 = vsel %vm270, 0, %v269
    %v272 = vsub.s32 32, %v271
    %v273 = vshll.u32 %v264, %v271
    %v274 = vshrl.u32 %v256, %v272
    %v275 = vor.u32 %v273, %v274
    %v276 = vsub.s32 4294967266, %v271
    %v277 = vadd.s32 %v276, 127
    %v278 = vshll.u32 %v277, 23
    %v279 = vor.u32 4788187, %v278
    %v280 = vand.u32 2147483647, %v279
    %v282 = vcvt.s32.f32 %v275
    %v283 = vmul.f32 %v282, %v280
    %v284 = vxor.u32 %v283, 2147483648
    %v285 = vsel %vm202, %v284, %v283
    %v286 = vsub.s32 4, %v262
    %v287 = vsel %vm202, %v286, %v262
    %v288 = vsel %vm201, %v81, %v285
    %v289 = vsel %vm201, 0, %v287
    %v290 = vcosq.f32.pop %v288
    %v291 = vsinq.f32.pop %v288
    %vm292 = vweird.f32 %v81
    %v293 = vadd.s32 %v289, 3
    %v294 = vand.u32 %v293, 3
    %vm295 = vcmp.lt.s32.totalorder %v294, 2
    %vm296 = vcmp.eq.s32.totalorder %v294, 0
    %v297 = vxor.u32 %v291, 2147483648
    %v298 = vsel %vm296, %v290, %v297
    %vm299 = vcmp.eq.s32.totalorder %v294, 2
    %v300 = vxor.u32 %v290, 2147483648
    %v301 = vsel %vm299, %v300, %v291
    %v302 = vsel %vm295, %v298, %v301
    %v303 = vsel %vm292, nan, %v302
    %v304 = vand.u32 2147483647, %v82
    %vm305 = vcmp.le.f32.partialorder %v304, 0.7853982
    %vm306 = vcmp.lt.s32.totalorder %v82, 0
    %v307 = vand.u32 %v82, 2139095040
    %v308 = vshrl.u32 %v307, 23
    %v309 = vsub.s32 %v308, 127
    %v310 = vand.u32 2147483647, %v82
    %v311 = vand.u32 %v310, 8388607
    %v312 = vor.u32 %v311, 8388608
    %v313 = vsub.s32 0, %v312
    %v314 = vadd.s32 %v309, 1
    %vm315 = vcmp.gt.s32.totalorder %v314, 0
    %v316 = vsel %vm315, %v314, 0
    %v317 = vshrl.u32 %v316, 5
    %v318 = vand.u32 %v316, 31
    %v319 = vsub.s32 32, %v318
    %v320 = vshrl.u32 683565275, %v319
    %v321 = vshll.u32 683565275, %v318
    %v322 = vshrl.u32 2475754826, %v319
    %v323 = vor.u32 %v321, %v322
    %v324 = vshll.u32 2475754826, %v318
    %v325 = vshrl.u32 2131351028, %v319
    %v326 = vor.u32 %v324, %v325
    %v327 = vshll.u32 2131351028, %v318
    %v328 = vshrl.u32 2102212464, %v319
    %v329 = vor.u32 %v327, %v328
    %v330 = vshll.u32 2102212464, %v318
    %v331 = vshrl.u32 920167782, %v319
    %v332 = vor.u32 %v330, %v331
    %v333 = vshll.u32 920167782, %v318
    %v334 = vshrl.u32 1326507024, %v319
    %v335 = vor.u32 %v333, %v334
    %vm336 = vcmp.lt.s32.totalorder %v317, 1
    %vm337 = vcmp.lt.s32.totalorder %v317, 2
    %vm338 = vcmp.lt.s32.totalorder %v317, 3
    %vm339 = vcmp.lt.s32.totalorder %v317, 4
    %v340 = vsel %vm336, %v320, %v323
    %v341 = vsel %vm339, %v329, 2102212464
    %v342 = vsel %vm338, %v326, %v341
    %v343 = vsel %vm337, %v340, %v342
    %v344 = vsel %vm336, %v323, %v326
    %v345 = vsel %vm339, %v332, 920167782
    %v346 = vsel %vm338, %v329, %v345
    %v347 = vsel %vm337, %v344, %v346
    %v348 = vsel %vm336, %v326, %v329
    %v349 = vsel %vm339, %v335, 1326507024
    %v350 = vsel %vm338, %v332, %v349
    %v351 = vsel %vm337, %v348, %v350
    %v352 = vshll.u32 %v312, 8
    %v353 = vmul.u32.u64.compose %v352, %v351
    %v354 = vextract.low.u32 %v353
    %v355 = vextract.high.u32 %v353
    %v356 = vmul.u32.u64.compose %v352, %v347
    %v357 = vextract.low.u32 %v356
    %v358 = vextract.high.u32 %v356
    %v359 = vmul.u32 %v352, %v343
    %v360 = vadd.s32 %v355, %v357
    %vm361 = vc.u32 %v355, %v357
    %v362 = vadd.s32 %v358, 1
    %v363 = vsel %vm361, %v362, %v358
    %v364 = vadd.s32 %v359, %v363
    %v365 = vadd.s32 %v364, 536870912
    %v366 = vshrl.u32 %v365, 30
    %v367 = vshll.u32 %v366, 30
    %v368 = vsub.s32 %v364, %v367
    %vm369 = vcmp.lt.s32.totalorder %v368, 0
    %v370 = vsub.s32 0, %v368
    %v371 = vsel %vm369, %v370, %v368
    %v372 = vclz %v371
    %v373 = vsub.s32 %v372, 2
    %vm374 = vcmp.gt.s32.totalorder 0, %v373
    %v375 = vsel %vm374, 0, %v373
    %v376 = vsub.s32 32, %v375
    %v377 = vshll.u32 %v368, %v375
    %v378 = vshrl.u32 %v360, %v376
    %v379 = vor.u32 %v377, %v378
    %v380 = vsub.s32 4294967266, %v375
    %v381 = vadd.s32 %v380, 127
    %v382 = vshll.u32 %v381, 23
    %v383 = vor.u32 4788187, %v382
    %v384 = vand.u32 2147483647, %v383
    %v386 = vcvt.s32.f32 %v379
    %v387 = vmul.f32 %v386, %v384
    %v388 = vxor.u32 %v387, 2147483648
    %v389 = vsel %vm306, %v388, %v387
    %v390 = vsub.s32 4, %v366
    %v391 = vsel %vm306, %v390, %v366
    %v392 = vsel %vm305, %v82, %v389
    %v393 = vsel %vm305, 0, %v391
    %v394 = vcosq.f32.pop %v392
    %v395 = vsinq.f32.pop %v392
    %vm396 = vweird.f32 %v82
    %v397 = vadd.s32 %v393, 3
    %v398 = vand.u32 %v397, 3
    %vm399 = vcmp.lt.s32.totalorder %v398, 2
    %vm400 = vcmp.eq.s32.totalorder %v398, 0
    %v401 = vxor.u32 %v395, 2147483648
    %v402 = vsel %vm400, %v394, %v401
    %vm403 = vcmp.eq.s32.totalorder %v398, 2
    %v404 = vxor.u32 %v394, 2147483648
    %v405 = vsel %vm403, %v404, %v395
    %v406 = vsel %vm399, %v402, %v405
    %v407 = vsel %vm396, nan, %v406
    %v408 = vand.u32 2147483647, %v83
    %vm409 = vcmp.le.f32.partialorder %v408, 0.7853982
    %vm410 = vcmp.lt.s32.totalorder %v83, 0
    %v411 = vand.u32 %v83, 2139095040
    %v412 = vshrl.u32 %v411, 23
    %v413 = vsub.s32 %v412, 127
    %v414 = vand.u32 2147483647, %v83
    %v415 = vand.u32 %v414, 8388607
    %v416 = vor.u32 %v415, 8388608
    %v417 = vsub.s32 0, %v416
    %v418 = vadd.s32 %v413, 1
    %vm419 = vcmp.gt.s32.totalorder %v418, 0
    %v420 = vsel %vm419, %v418, 0
    %v421 = vshrl.u32 %v420, 5
    %v422 = vand.u32 %v420, 31
    %v423 = vsub.s32 32, %v422
    %v424 = vshrl.u32 683565275, %v423
    %v425 = vshll.u32 683565275, %v422
    %v426 = vshrl.u32 2475754826, %v423
    %v427 = vor.u32 %v425, %v426
    %v428 = vshll.u32 2475754826, %v422
    %v429 = vshrl.u32 2131351028, %v423
    %v430 = vor.u32 %v428, %v429
    %v431 = vshll.u32 2131351028, %v422
    %v432 = vshrl.u32 2102212464, %v423
    %v433 = vor.u32 %v431, %v432
    %v434 = vshll.u32 2102212464, %v422
    %v435 = vshrl.u32 920167782, %v423
    %v436 = vor.u32 %v434, %v435
    %v437 = vshll.u32 920167782, %v422
    %v438 = vshrl.u32 1326507024, %v423
    %v439 = vor.u32 %v437, %v438
    %vm440 = vcmp.lt.s32.totalorder %v421, 1
    %vm441 = vcmp.lt.s32.totalorder %v421, 2
    %vm442 = vcmp.lt.s32.totalorder %v421, 3
    %vm443 = vcmp.lt.s32.totalorder %v421, 4
    %v444 = vsel %vm440, %v424, %v427
    %v445 = vsel %vm443, %v433, 2102212464
    %v446 = vsel %vm442, %v430, %v445
    %v447 = vsel %vm441, %v444, %v446
    %v448 = vsel %vm440, %v427, %v430
    %v449 = vsel %vm443, %v436, 920167782
    %v450 = vsel %vm442, %v433, %v449
    %v451 = vsel %vm441, %v448, %v450
    %v452 = vsel %vm440, %v430, %v433
    %v453 = vsel %vm443, %v439, 1326507024
    %v454 = vsel %vm442, %v436, %v453
    %v455 = vsel %vm441, %v452, %v454
    %v456 = vshll.u32 %v416, 8
    %v457 = vmul.u32.u64.compose %v456, %v455
    %v458 = vextract.low.u32 %v457
    %v459 = vextract.high.u32 %v457
    %v460 = vmul.u32.u64.compose %v456, %v451
    %v461 = vextract.low.u32 %v460
    %v462 = vextract.high.u32 %v460
    %v463 = vmul.u32 %v456, %v447
    %v464 = vadd.s32 %v459, %v461
    %vm465 = vc.u32 %v459, %v461
    %v466 = vadd.s32 %v462, 1
    %v467 = vsel %vm465, %v466, %v462
    %v468 = vadd.s32 %v463, %v467
    %v469 = vadd.s32 %v468, 536870912
    %v470 = vshrl.u32 %v469, 30
    %v471 = vshll.u32 %v470, 30
    %v472 = vsub.s32 %v468, %v471
    %vm473 = vcmp.lt.s32.totalorder %v472, 0
    %v474 = vsub.s32 0, %v472
    %v475 = vsel %vm473, %v474, %v472
    %v476 = vclz %v475
    %v477 = vsub.s32 %v476, 2
    %vm478 = vcmp.gt.s32.totalorder 0, %v477
    %v479 = vsel %vm478, 0, %v477
    %v480 = vsub.s32 32, %v479
    %v481 = vshll.u32 %v472, %v479
    %v482 = vshrl.u32 %v464, %v480
    %v483 = vor.u32 %v481, %v482
    %v484 = vsub.s32 4294967266, %v479
    %v485 = vadd.s32 %v484, 127
    %v486 = vshll.u32 %v485, 23
    %v487 = vor.u32 4788187, %v486
    %v488 = vand.u32 2147483647, %v487
    %v490 = vcvt.s32.f32 %v483
    %v491 = vmul.f32 %v490, %v488
    %v492 = vxor.u32 %v491, 2147483648
    %v493 = vsel %vm410, %v492, %v491
    %v494 = vsub.s32 4, %v470
    %v495 = vsel %vm410, %v494, %v470
    %v496 = vsel %vm409, %v83, %v493
    %v497 = vsel %vm409, 0, %v495
    %v498 = vcosq.f32.pop %v496
    %v499 = vsinq.f32.pop %v496
    %vm500 = vweird.f32 %v83
    %v501 = vadd.s32 %v497, 3
    %v502 = vand.u32 %v501, 3
    %vm503 = vcmp.lt.s32.totalorder %v502, 2
    %vm504 = vcmp.eq.s32.totalorder %v502, 0
    %v505 = vxor.u32 %v499, 2147483648
    %v506 = vsel %vm504, %v498, %v505
    %vm507 = vcmp.eq.s32.totalorder %v502, 2
    %v508 = vxor.u32 %v498, 2147483648
    %v509 = vsel %vm507, %v508, %v499
    %v510 = vsel %vm503, %v506, %v509
    %v511 = vsel %vm500, nan, %v510
    %v512 = vand.u32 2147483647, %v84
    %vm513 = vcmp.le.f32.partialorder %v512, 0.7853982
    %vm514 = vcmp.lt.s32.totalorder %v84, 0
    %v515 = vand.u32 %v84, 2139095040
    %v516 = vshrl.u32 %v515, 23
    %v517 = vsub.s32 %v516, 127
    %v518 = vand.u32 2147483647, %v84
    %v519 = vand.u32 %v518, 8388607
    %v520 = vor.u32 %v519, 8388608
    %v521 = vsub.s32 0, %v520
    %v522 = vadd.s32 %v517, 1
    %vm523 = vcmp.gt.s32.totalorder %v522, 0
    %v524 = vsel %vm523, %v522, 0
    %v525 = vshrl.u32 %v524, 5
    %v526 = vand.u32 %v524, 31
    %v527 = vsub.s32 32, %v526
    %v528 = vshrl.u32 683565275, %v527
    %v529 = vshll.u32 683565275, %v526
    %v530 = vshrl.u32 2475754826, %v527
    %v531 = vor.u32 %v529, %v530
    %v532 = vshll.u32 2475754826, %v526
    %v533 = vshrl.u32 2131351028, %v527
    %v534 = vor.u32 %v532, %v533
    %v535 = vshll.u32 2131351028, %v526
    %v536 = vshrl.u32 2102212464, %v527
    %v537 = vor.u32 %v535, %v536
    %v538 = vshll.u32 2102212464, %v526
    %v539 = vshrl.u32 920167782, %v527
    %v540 = vor.u32 %v538, %v539
    %v541 = vshll.u32 920167782, %v526
    %v542 = vshrl.u32 1326507024, %v527
    %v543 = vor.u32 %v541, %v542
    %vm544 = vcmp.lt.s32.totalorder %v525, 1
    %vm545 = vcmp.lt.s32.totalorder %v525, 2
    %vm546 = vcmp.lt.s32.totalorder %v525, 3
    %vm547 = vcmp.lt.s32.totalorder %v525, 4
    %v548 = vsel %vm544, %v528, %v531
    %v549 = vsel %vm547, %v537, 2102212464
    %v550 = vsel %vm546, %v534, %v549
    %v551 = vsel %vm545, %v548, %v550
    %v552 = vsel %vm544, %v531, %v534
    %v553 = vsel %vm547, %v540, 920167782
    %v554 = vsel %vm546, %v537, %v553
    %v555 = vsel %vm545, %v552, %v554
    %v556 = vsel %vm544, %v534, %v537
    %v557 = vsel %vm547, %v543, 1326507024
    %v558 = vsel %vm546, %v540, %v557
    %v559 = vsel %vm545, %v556, %v558
    %v560 = vshll.u32 %v520, 8
    %v561 = vmul.u32.u64.compose %v560, %v559
    %v562 = vextract.low.u32 %v561
    %v563 = vextract.high.u32 %v561
    %v564 = vmul.u32.u64.compose %v560, %v555
    %v565 = vextract.low.u32 %v564
    %v566 = vextract.high.u32 %v564
    %v567 = vmul.u32 %v560, %v551
    %v568 = vadd.s32 %v563, %v565
    %vm569 = vc.u32 %v563, %v565
    %v570 = vadd.s32 %v566, 1
    %v571 = vsel %vm569, %v570, %v566
    %v572 = vadd.s32 %v567, %v571
    %v573 = vadd.s32 %v572, 536870912
    %v574 = vshrl.u32 %v573, 30
    %v575 = vshll.u32 %v574, 30
    %v576 = vsub.s32 %v572, %v575
    %vm577 = vcmp.lt.s32.totalorder %v576, 0
    %v578 = vsub.s32 0, %v576
    %v579 = vsel %vm577, %v578, %v576
    %v580 = vclz %v579
    %v581 = vsub.s32 %v580, 2
    %vm582 = vcmp.gt.s32.totalorder 0, %v581
    %v583 = vsel %vm582, 0, %v581
    %v584 = vsub.s32 32, %v583
    %v585 = vshll.u32 %v576, %v583
    %v586 = vshrl.u32 %v568, %v584
    %v587 = vor.u32 %v585, %v586
    %v588 = vsub.s32 4294967266, %v583
    %v589 = vadd.s32 %v588, 127
    %v590 = vshll.u32 %v589, 23
    %v591 = vor.u32 4788187, %v590
    %v592 = vand.u32 2147483647, %v591
    %v594 = vcvt.s32.f32 %v587
    %v595 = vmul.f32 %v594, %v592
    %v596 = vxor.u32 %v595, 2147483648
    %v597 = vsel %vm514, %v596, %v595
    %v598 = vsub.s32 4, %v574
    %v599 = vsel %vm514, %v598, %v574
    %v600 = vsel %vm513, %v84, %v597
    %v601 = vsel %vm513, 0, %v599
    %v602 = vcosq.f32.pop %v600
    %v603 = vsinq.f32.pop %v600
    %vm604 = vweird.f32 %v84
    %v605 = vadd.s32 %v601, 3
    %v606 = vand.u32 %v605, 3
    %vm607 = vcmp.lt.s32.totalorder %v606, 2
    %vm608 = vcmp.eq.s32.totalorder %v606, 0
    %v609 = vxor.u32 %v603, 2147483648
    %v610 = vsel %vm608, %v602, %v609
    %vm611 = vcmp.eq.s32.totalorder %v606, 2
    %v612 = vxor.u32 %v602, 2147483648
    %v613 = vsel %vm611, %v612, %v603
    %v614 = vsel %vm607, %v610, %v613
    %v615 = vsel %vm604, nan, %v614
    %v616 = vand.u32 2147483647, %v85
    %vm617 = vcmp.le.f32.partialorder %v616, 0.7853982
    %vm618 = vcmp.lt.s32.totalorder %v85, 0
    %v619 = vand.u32 %v85, 2139095040
    %v620 = vshrl.u32 %v619, 23
    %v621 = vsub.s32 %v620, 127
    %v622 = vand.u32 2147483647, %v85
    %v623 = vand.u32 %v622, 8388607
    %v624 = vor.u32 %v623, 8388608
    %v625 = vsub.s32 0, %v624
    %v626 = vadd.s32 %v621, 1
    %vm627 = vcmp.gt.s32.totalorder %v626, 0
    %v628 = vsel %vm627, %v626, 0
    %v629 = vshrl.u32 %v628, 5
    %v630 = vand.u32 %v628, 31
    %v631 = vsub.s32 32, %v630
    %v632 = vshrl.u32 683565275, %v631
    %v633 = vshll.u32 683565275, %v630
    %v634 = vshrl.u32 2475754826, %v631
    %v635 = vor.u32 %v633, %v634
    %v636 = vshll.u32 2475754826, %v630
    %v637 = vshrl.u32 2131351028, %v631
    %v638 = vor.u32 %v636, %v637
    %v639 = vshll.u32 2131351028, %v630
    %v640 = vshrl.u32 2102212464, %v631
    %v641 = vor.u32 %v639, %v640
    %v642 = vshll.u32 2102212464, %v630
    %v643 = vshrl.u32 920167782, %v631
    %v644 = vor.u32 %v642, %v643
    %v645 = vshll.u32 920167782, %v630
    %v646 = vshrl.u32 1326507024, %v631
    %v647 = vor.u32 %v645, %v646
    %vm648 = vcmp.lt.s32.totalorder %v629, 1
    %vm649 = vcmp.lt.s32.totalorder %v629, 2
    %vm650 = vcmp.lt.s32.totalorder %v629, 3
    %vm651 = vcmp.lt.s32.totalorder %v629, 4
    %v652 = vsel %vm648, %v632, %v635
    %v653 = vsel %vm651, %v641, 2102212464
    %v654 = vsel %vm650, %v638, %v653
    %v655 = vsel %vm649, %v652, %v654
    %v656 = vsel %vm648, %v635, %v638
    %v657 = vsel %vm651, %v644, 920167782
    %v658 = vsel %vm650, %v641, %v657
    %v659 = vsel %vm649, %v656, %v658
    %v660 = vsel %vm648, %v638, %v641
    %v661 = vsel %vm651, %v647, 1326507024
    %v662 = vsel %vm650, %v644, %v661
    %v663 = vsel %vm649, %v660, %v662
    %v664 = vshll.u32 %v624, 8
    %v665 = vmul.u32.u64.compose %v664, %v663
    %v666 = vextract.low.u32 %v665
    %v667 = vextract.high.u32 %v665
    %v668 = vmul.u32.u64.compose %v664, %v659
    %v669 = vextract.low.u32 %v668
    %v670 = vextract.high.u32 %v668
    %v671 = vmul.u32 %v664, %v655
    %v672 = vadd.s32 %v667, %v669
    %vm673 = vc.u32 %v667, %v669
    %v674 = vadd.s32 %v670, 1
    %v675 = vsel %vm673, %v674, %v670
    %v676 = vadd.s32 %v671, %v675
    %v677 = vadd.s32 %v676, 536870912
    %v678 = vshrl.u32 %v677, 30
    %v679 = vshll.u32 %v678, 30
    %v680 = vsub.s32 %v676, %v679
    %vm681 = vcmp.lt.s32.totalorder %v680, 0
    %v682 = vsub.s32 0, %v680
    %v683 = vsel %vm681, %v682, %v680
    %v684 = vclz %v683
    %v685 = vsub.s32 %v684, 2
    %vm686 = vcmp.gt.s32.totalorder 0, %v685
    %v687 = vsel %vm686, 0, %v685
    %v688 = vsub.s32 32, %v687
    %v689 = vshll.u32 %v680, %v687
    %v690 = vshrl.u32 %v672, %v688
    %v691 = vor.u32 %v689, %v690
    %v692 = vsub.s32 4294967266, %v687
    %v693 = vadd.s32 %v692, 127
    %v694 = vshll.u32 %v693, 23
    %v695 = vor.u32 4788187, %v694
    %v696 = vand.u32 2147483647, %v695
    %v698 = vcvt.s32.f32 %v691
    %v699 = vmul.f32 %v698, %v696
    %v700 = vxor.u32 %v699, 2147483648
    %v701 = vsel %vm618, %v700, %v699
    %v702 = vsub.s32 4, %v678
    %v703 = vsel %vm618, %v702, %v678
    %v704 = vsel %vm617, %v85, %v701
    %v705 = vsel %vm617, 0, %v703
    %v706 = vcosq.f32.pop %v704
    %v707 = vsinq.f32.pop %v704
    %vm708 = vweird.f32 %v85
    %v709 = vadd.s32 %v705, 3
    %v710 = vand.u32 %v709, 3
    %vm711 = vcmp.lt.s32.totalorder %v710, 2
    %vm712 = vcmp.eq.s32.totalorder %v710, 0
    %v713 = vxor.u32 %v707, 2147483648
    %v714 = vsel %vm712, %v706, %v713
    %vm715 = vcmp.eq.s32.totalorder %v710, 2
    %v716 = vxor.u32 %v706, 2147483648
    %v717 = vsel %vm715, %v716, %v707
    %v718 = vsel %vm711, %v714, %v717
    %v719 = vsel %vm708, nan, %v718
    %v720 = vand.u32 2147483647, %v86
    %vm721 = vcmp.le.f32.partialorder %v720, 0.7853982
    %vm722 = vcmp.lt.s32.totalorder %v86, 0
    %v723 = vand.u32 %v86, 2139095040
    %v724 = vshrl.u32 %v723, 23
    %v725 = vsub.s32 %v724, 127
    %v726 = vand.u32 2147483647, %v86
    %v727 = vand.u32 %v726, 8388607
    %v728 = vor.u32 %v727, 8388608
    %v729 = vsub.s32 0, %v728
    %v730 = vadd.s32 %v725, 1
    %vm731 = vcmp.gt.s32.totalorder %v730, 0
    %v732 = vsel %vm731, %v730, 0
    %v733 = vshrl.u32 %v732, 5
    %v734 = vand.u32 %v732, 31
    %v735 = vsub.s32 32, %v734
    %v736 = vshrl.u32 683565275, %v735
    %v737 = vshll.u32 683565275, %v734
    %v738 = vshrl.u32 2475754826, %v735
    %v739 = vor.u32 %v737, %v738
    %v740 = vshll.u32 2475754826, %v734
    %v741 = vshrl.u32 2131351028, %v735
    %v742 = vor.u32 %v740, %v741
    %v743 = vshll.u32 2131351028, %v734
    %v744 = vshrl.u32 2102212464, %v735
    %v745 = vor.u32 %v743, %v744
    %v746 = vshll.u32 2102212464, %v734
    %v747 = vshrl.u32 920167782, %v735
    %v748 = vor.u32 %v746, %v747
    %v749 = vshll.u32 920167782, %v734
    %v750 = vshrl.u32 1326507024, %v735
    %v751 = vor.u32 %v749, %v750
    %vm752 = vcmp.lt.s32.totalorder %v733, 1
    %vm753 = vcmp.lt.s32.totalorder %v733, 2
    %vm754 = vcmp.lt.s32.totalorder %v733, 3
    %vm755 = vcmp.lt.s32.totalorder %v733, 4
    %v756 = vsel %vm752, %v736, %v739
    %v757 = vsel %vm755, %v745, 2102212464
    %v758 = vsel %vm754, %v742, %v757
    %v759 = vsel %vm753, %v756, %v758
    %v760 = vsel %vm752, %v739, %v742
    %v761 = vsel %vm755, %v748, 920167782
    %v762 = vsel %vm754, %v745, %v761
    %v763 = vsel %vm753, %v760, %v762
    %v764 = vsel %vm752, %v742, %v745
    %v765 = vsel %vm755, %v751, 1326507024
    %v766 = vsel %vm754, %v748, %v765
    %v767 = vsel %vm753, %v764, %v766
    %v768 = vshll.u32 %v728, 8
    %v769 = vmul.u32.u64.compose %v768, %v767
    %v770 = vextract.low.u32 %v769
    %v771 = vextract.high.u32 %v769
    %v772 = vmul.u32.u64.compose %v768, %v763
    %v773 = vextract.low.u32 %v772
    %v774 = vextract.high.u32 %v772
    %v775 = vmul.u32 %v768, %v759
    %v776 = vadd.s32 %v771, %v773
    %vm777 = vc.u32 %v771, %v773
    %v778 = vadd.s32 %v774, 1
    %v779 = vsel %vm777, %v778, %v774
    %v780 = vadd.s32 %v775, %v779
    %v781 = vadd.s32 %v780, 536870912
    %v782 = vshrl.u32 %v781, 30
    %v783 = vshll.u32 %v782, 30
    %v784 = vsub.s32 %v780, %v783
    %vm785 = vcmp.lt.s32.totalorder %v784, 0
    %v786 = vsub.s32 0, %v784
    %v787 = vsel %vm785, %v786, %v784
    %v788 = vclz %v787
    %v789 = vsub.s32 %v788, 2
    %vm790 = vcmp.gt.s32.totalorder 0, %v789
    %v791 = vsel %vm790, 0, %v789
    %v792 = vsub.s32 32, %v791
    %v793 = vshll.u32 %v784, %v791
    %v794 = vshrl.u32 %v776, %v792
    %v795 = vor.u32 %v793, %v794
    %v796 = vsub.s32 4294967266, %v791
    %v797 = vadd.s32 %v796, 127
    %v798 = vshll.u32 %v797, 23
    %v799 = vor.u32 4788187, %v798
    %v800 = vand.u32 2147483647, %v799
    %v802 = vcvt.s32.f32 %v795
    %v803 = vmul.f32 %v802, %v800
    %v804 = vxor.u32 %v803, 2147483648
    %v805 = vsel %vm722, %v804, %v803
    %v806 = vsub.s32 4, %v782
    %v807 = vsel %vm722, %v806, %v782
    %v808 = vsel %vm721, %v86, %v805
    %v809 = vsel %vm721, 0, %v807
    %v810 = vcosq.f32.pop %v808
    %v811 = vsinq.f32.pop %v808
    %vm812 = vweird.f32 %v86
    %v813 = vadd.s32 %v809, 3
    %v814 = vand.u32 %v813, 3
    %vm815 = vcmp.lt.s32.totalorder %v814, 2
    %vm816 = vcmp.eq.s32.totalorder %v814, 0
    %v817 = vxor.u32 %v811, 2147483648
    %v818 = vsel %vm816, %v810, %v817
    %vm819 = vcmp.eq.s32.totalorder %v814, 2
    %v820 = vxor.u32 %v810, 2147483648
    %v821 = vsel %vm819, %v820, %v811
    %v822 = vsel %vm815, %v818, %v821
    %v823 = vsel %vm812, nan, %v822
    %v824 = vand.u32 2147483647, %v87
    %vm825 = vcmp.le.f32.partialorder %v824, 0.7853982
    %vm826 = vcmp.lt.s32.totalorder %v87, 0
    %v827 = vand.u32 %v87, 2139095040
    %v828 = vshrl.u32 %v827, 23
    %v829 = vsub.s32 %v828, 127
    %v830 = vand.u32 2147483647, %v87
    %v831 = vand.u32 %v830, 8388607
    %v832 = vor.u32 %v831, 8388608
    %v833 = vsub.s32 0, %v832
    %v834 = vadd.s32 %v829, 1
    %vm835 = vcmp.gt.s32.totalorder %v834, 0
    %v836 = vsel %vm835, %v834, 0
    %v837 = vshrl.u32 %v836, 5
    %v838 = vand.u32 %v836, 31
    %v839 = vsub.s32 32, %v838
    %v840 = vshrl.u32 683565275, %v839
    %v841 = vshll.u32 683565275, %v838
    %v842 = vshrl.u32 2475754826, %v839
    %v843 = vor.u32 %v841, %v842
    %v844 = vshll.u32 2475754826, %v838
    %v845 = vshrl.u32 2131351028, %v839
    %v846 = vor.u32 %v844, %v845
    %v847 = vshll.u32 2131351028, %v838
    %v848 = vshrl.u32 2102212464, %v839
    %v849 = vor.u32 %v847, %v848
    %v850 = vshll.u32 2102212464, %v838
    %v851 = vshrl.u32 920167782, %v839
    %v852 = vor.u32 %v850, %v851
    %v853 = vshll.u32 920167782, %v838
    %v854 = vshrl.u32 1326507024, %v839
    %v855 = vor.u32 %v853, %v854
    %vm856 = vcmp.lt.s32.totalorder %v837, 1
    %vm857 = vcmp.lt.s32.totalorder %v837, 2
    %vm858 = vcmp.lt.s32.totalorder %v837, 3
    %vm859 = vcmp.lt.s32.totalorder %v837, 4
    %v860 = vsel %vm856, %v840, %v843
    %v861 = vsel %vm859, %v849, 2102212464
    %v862 = vsel %vm858, %v846, %v861
    %v863 = vsel %vm857, %v860, %v862
    %v864 = vsel %vm856, %v843, %v846
    %v865 = vsel %vm859, %v852, 920167782
    %v866 = vsel %vm858, %v849, %v865
    %v867 = vsel %vm857, %v864, %v866
    %v868 = vsel %vm856, %v846, %v849
    %v869 = vsel %vm859, %v855, 1326507024
    %v870 = vsel %vm858, %v852, %v869
    %v871 = vsel %vm857, %v868, %v870
    %v872 = vshll.u32 %v832, 8
    %v873 = vmul.u32.u64.compose %v872, %v871
    %v874 = vextract.low.u32 %v873
    %v875 = vextract.high.u32 %v873
    %v876 = vmul.u32.u64.compose %v872, %v867
    %v877 = vextract.low.u32 %v876
    %v878 = vextract.high.u32 %v876
    %v879 = vmul.u32 %v872, %v863
    %v880 = vadd.s32 %v875, %v877
    %vm881 = vc.u32 %v875, %v877
    %v882 = vadd.s32 %v878, 1
    %v883 = vsel %vm881, %v882, %v878
    %v884 = vadd.s32 %v879, %v883
    %v885 = vadd.s32 %v884, 536870912
    %v886 = vshrl.u32 %v885, 30
    %v887 = vshll.u32 %v886, 30
    %v888 = vsub.s32 %v884, %v887
    %vm889 = vcmp.lt.s32.totalorder %v888, 0
    %v890 = vsub.s32 0, %v888
    %v891 = vsel %vm889, %v890, %v888
    %v892 = vclz %v891
    %v893 = vsub.s32 %v892, 2
    %vm894 = vcmp.gt.s32.totalorder 0, %v893
    %v895 = vsel %vm894, 0, %v893
    %v896 = vsub.s32 32, %v895
    %v897 = vshll.u32 %v888, %v895
    %v898 = vshrl.u32 %v880, %v896
    %v899 = vor.u32 %v897, %v898
    %v900 = vsub.s32 4294967266, %v895
    %v901 = vadd.s32 %v900, 127
    %v902 = vshll.u32 %v901, 23
    %v903 = vor.u32 4788187, %v902
    %v904 = vand.u32 2147483647, %v903
    %v906 = vcvt.s32.f32 %v899
    %v907 = vmul.f32 %v906, %v904
    %v908 = vxor.u32 %v907, 2147483648
    %v909 = vsel %vm826, %v908, %v907
    %v910 = vsub.s32 4, %v886
    %v911 = vsel %vm826, %v910, %v886
    %v912 = vsel %vm825, %v87, %v909
    %v913 = vsel %vm825, 0, %v911
    %v914 = vcosq.f32.pop %v912
    %v915 = vsinq.f32.pop %v912
    %vm916 = vweird.f32 %v87
    %v917 = vadd.s32 %v913, 3
    %v918 = vand.u32 %v917, 3
    %vm919 = vcmp.lt.s32.totalorder %v918, 2
    %vm920 = vcmp.eq.s32.totalorder %v918, 0
    %v921 = vxor.u32 %v915, 2147483648
    %v922 = vsel %vm920, %v914, %v921
    %vm923 = vcmp.eq.s32.totalorder %v918, 2
    %v924 = vxor.u32 %v914, 2147483648
    %v925 = vsel %vm923, %v924, %v915
    %v926 = vsel %vm919, %v922, %v925
    %v927 = vsel %vm916, nan, %v926
    %v928 = vand.u32 2147483647, %v80
    %vm929 = vcmp.le.f32.partialorder %v928, 0.7853982
    %vm930 = vcmp.lt.s32.totalorder %v80, 0
    %v931 = vand.u32 %v80, 2139095040
    %v932 = vshrl.u32 %v931, 23
    %v933 = vsub.s32 %v932, 127
    %v934 = vand.u32 2147483647, %v80
    %v935 = vand.u32 %v934, 8388607
    %v936 = vor.u32 %v935, 8388608
    %v937 = vsub.s32 0, %v936
    %v938 = vadd.s32 %v933, 1
    %vm939 = vcmp.gt.s32.totalorder %v938, 0
    %v940 = vsel %vm939, %v938, 0
    %v941 = vshrl.u32 %v940, 5
    %v942 = vand.u32 %v940, 31
    %v943 = vsub.s32 32, %v942
    %v944 = vshrl.u32 683565275, %v943
    %v945 = vshll.u32 683565275, %v942
    %v946 = vshrl.u32 2475754826, %v943
    %v947 = vor.u32 %v945, %v946
    %v948 = vshll.u32 2475754826, %v942
    %v949 = vshrl.u32 2131351028, %v943
    %v950 = vor.u32 %v948, %v949
    %v951 = vshll.u32 2131351028, %v942
    %v952 = vshrl.u32 2102212464, %v943
    %v953 = vor.u32 %v951, %v952
    %v954 = vshll.u32 2102212464, %v942
    %v955 = vshrl.u32 920167782, %v943
    %v956 = vor.u32 %v954, %v955
    %v957 = vshll.u32 920167782, %v942
    %v958 = vshrl.u32 1326507024, %v943
    %v959 = vor.u32 %v957, %v958
    %vm960 = vcmp.lt.s32.totalorder %v941, 1
    %vm961 = vcmp.lt.s32.totalorder %v941, 2
    %vm962 = vcmp.lt.s32.totalorder %v941, 3
    %vm963 = vcmp.lt.s32.totalorder %v941, 4
    %v964 = vsel %vm960, %v944, %v947
    %v965 = vsel %vm963, %v953, 2102212464
    %v966 = vsel %vm962, %v950, %v965
    %v967 = vsel %vm961, %v964, %v966
    %v968 = vsel %vm960, %v947, %v950
    %v969 = vsel %vm963, %v956, 920167782
    %v970 = vsel %vm962, %v953, %v969
    %v971 = vsel %vm961, %v968, %v970
    %v972 = vsel %vm960, %v950, %v953
    %v973 = vsel %vm963, %v959, 1326507024
    %v974 = vsel %vm962, %v956, %v973
    %v975 = vsel %vm961, %v972, %v974
    %v976 = vshll.u32 %v936, 8
    %v977 = vmul.u32.u64.compose %v976, %v975
    %v978 = vextract.low.u32 %v977
    %v979 = vextract.high.u32 %v977
    %v980 = vmul.u32.u64.compose %v976, %v971
    %v981 = vextract.low.u32 %v980
    %v982 = vextract.high.u32 %v980
    %v983 = vmul.u32 %v976, %v967
    %v984 = vadd.s32 %v979, %v981
    %vm985 = vc.u32 %v979, %v981
    %v986 = vadd.s32 %v982, 1
    %v987 = vsel %vm985, %v986, %v982
    %v988 = vadd.s32 %v983, %v987
    %v989 = vadd.s32 %v988, 536870912
    %v990 = vshrl.u32 %v989, 30
    %v991 = vshll.u32 %v990, 30
    %v992 = vsub.s32 %v988, %v991
    %vm993 = vcmp.lt.s32.totalorder %v992, 0
    %v994 = vsub.s32 0, %v992
    %v995 = vsel %vm993, %v994, %v992
    %v996 = vclz %v995
    %v997 = vsub.s32 %v996, 2
    %vm998 = vcmp.gt.s32.totalorder 0, %v997
    %v999 = vsel %vm998, 0, %v997
    %v1000 = vsub.s32 32, %v999
    %v1001 = vshll.u32 %v992, %v999
    %v1002 = vshrl.u32 %v984, %v1000
    %v1003 = vor.u32 %v1001, %v1002
    %v1004 = vsub.s32 4294967266, %v999
    %v1005 = vadd.s32 %v1004, 127
    %v1006 = vshll.u32 %v1005, 23
    %v1007 = vor.u32 4788187, %v1006
    %v1008 = vand.u32 2147483647, %v1007
    %v1010 = vcvt.s32.f32 %v1003
    %v1011 = vmul.f32 %v1010, %v1008
    %v1012 = vxor.u32 %v1011, 2147483648
    %v1013 = vsel %vm930, %v1012, %v1011
    %v1014 = vsub.s32 4, %v990
    %v1015 = vsel %vm930, %v1014, %v990
    %v1016 = vsel %vm929, %v80, %v1013
    %v1017 = vsel %vm929, 0, %v1015
    %v1018 = vcosq.f32.pop %v1016
    %v1019 = vsinq.f32.pop %v1016
    %vm1020 = vweird.f32 %v80
    %v1021 = vand.u32 %v1017, 3
    %vm1022 = vcmp.lt.s32.totalorder %v1021, 2
    %vm1023 = vcmp.eq.s32.totalorder %v1021, 0
    %v1024 = vxor.u32 %v1019, 2147483648
    %v1025 = vsel %vm1023, %v1018, %v1024
    %vm1026 = vcmp.eq.s32.totalorder %v1021, 2
    %v1027 = vxor.u32 %v1018, 2147483648
    %v1028 = vsel %vm1026, %v1027, %v1019
    %v1029 = vsel %vm1022, %v1025, %v1028
    %v1030 = vsel %vm1020, nan, %v1029
    %v1031 = vand.u32 2147483647, %v81
    %vm1032 = vcmp.le.f32.partialorder %v1031, 0.7853982
    %vm1033 = vcmp.lt.s32.totalorder %v81, 0
    %v1034 = vand.u32 %v81, 2139095040
    %v1035 = vshrl.u32 %v1034, 23
    %v1036 = vsub.s32 %v1035, 127
    %v1037 = vand.u32 2147483647, %v81
    %v1038 = vand.u32 %v1037, 8388607
    %v1039 = vor.u32 %v1038, 8388608
    %v1040 = vsub.s32 0, %v1039
    %v1041 = vadd.s32 %v1036, 1
    %vm1042 = vcmp.gt.s32.totalorder %v1041, 0
    %v1043 = vsel %vm1042, %v1041, 0
    %v1044 = vshrl.u32 %v1043, 5
    %v1045 = vand.u32 %v1043, 31
    %v1046 = vsub.s32 32, %v1045
    %v1047 = vshrl.u32 683565275, %v1046
    %v1048 = vshll.u32 683565275, %v1045
    %v1049 = vshrl.u32 2475754826, %v1046
    %v1050 = vor.u32 %v1048, %v1049
    %v1051 = vshll.u32 2475754826, %v1045
    %v1052 = vshrl.u32 2131351028, %v1046
    %v1053 = vor.u32 %v1051, %v1052
    %v1054 = vshll.u32 2131351028, %v1045
    %v1055 = vshrl.u32 2102212464, %v1046
    %v1056 = vor.u32 %v1054, %v1055
    %v1057 = vshll.u32 2102212464, %v1045
    %v1058 = vshrl.u32 920167782, %v1046
    %v1059 = vor.u32 %v1057, %v1058
    %v1060 = vshll.u32 920167782, %v1045
    %v1061 = vshrl.u32 1326507024, %v1046
    %v1062 = vor.u32 %v1060, %v1061
    %vm1063 = vcmp.lt.s32.totalorder %v1044, 1
    %vm1064 = vcmp.lt.s32.totalorder %v1044, 2
    %vm1065 = vcmp.lt.s32.totalorder %v1044, 3
    %vm1066 = vcmp.lt.s32.totalorder %v1044, 4
    %v1067 = vsel %vm1063, %v1047, %v1050
    %v1068 = vsel %vm1066, %v1056, 2102212464
    %v1069 = vsel %vm1065, %v1053, %v1068
    %v1070 = vsel %vm1064, %v1067, %v1069
    %v1071 = vsel %vm1063, %v1050, %v1053
    %v1072 = vsel %vm1066, %v1059, 920167782
    %v1073 = vsel %vm1065, %v1056, %v1072
    %v1074 = vsel %vm1064, %v1071, %v1073
    %v1075 = vsel %vm1063, %v1053, %v1056
    %v1076 = vsel %vm1066, %v1062, 1326507024
    %v1077 = vsel %vm1065, %v1059, %v1076
    %v1078 = vsel %vm1064, %v1075, %v1077
    %v1079 = vshll.u32 %v1039, 8
    %v1080 = vmul.u32.u64.compose %v1079, %v1078
    %v1081 = vextract.low.u32 %v1080
    %v1082 = vextract.high.u32 %v1080
    %v1083 = vmul.u32.u64.compose %v1079, %v1074
    %v1084 = vextract.low.u32 %v1083
    %v1085 = vextract.high.u32 %v1083
    %v1086 = vmul.u32 %v1079, %v1070
    %v1087 = vadd.s32 %v1082, %v1084
    %vm1088 = vc.u32 %v1082, %v1084
    %v1089 = vadd.s32 %v1085, 1
    %v1090 = vsel %vm1088, %v1089, %v1085
    %v1091 = vadd.s32 %v1086, %v1090
    %v1092 = vadd.s32 %v1091, 536870912
    %v1093 = vshrl.u32 %v1092, 30
    %v1094 = vshll.u32 %v1093, 30
    %v1095 = vsub.s32 %v1091, %v1094
    %vm1096 = vcmp.lt.s32.totalorder %v1095, 0
    %v1097 = vsub.s32 0, %v1095
    %v1098 = vsel %vm1096, %v1097, %v1095
    %v1099 = vclz %v1098
    %v1100 = vsub.s32 %v1099, 2
    %vm1101 = vcmp.gt.s32.totalorder 0, %v1100
    %v1102 = vsel %vm1101, 0, %v1100
    %v1103 = vsub.s32 32, %v1102
    %v1104 = vshll.u32 %v1095, %v1102
    %v1105 = vshrl.u32 %v1087, %v1103
    %v1106 = vor.u32 %v1104, %v1105
    %v1107 = vsub.s32 4294967266, %v1102
    %v1108 = vadd.s32 %v1107, 127
    %v1109 = vshll.u32 %v1108, 23
    %v1110 = vor.u32 4788187, %v1109
    %v1111 = vand.u32 2147483647, %v1110
    %v1113 = vcvt.s32.f32 %v1106
    %v1114 = vmul.f32 %v1113, %v1111
    %v1115 = vxor.u32 %v1114, 2147483648
    %v1116 = vsel %vm1033, %v1115, %v1114
    %v1117 = vsub.s32 4, %v1093
    %v1118 = vsel %vm1033, %v1117, %v1093
    %v1119 = vsel %vm1032, %v81, %v1116
    %v1120 = vsel %vm1032, 0, %v1118
    %v1121 = vcosq.f32.pop %v1119
    %v1122 = vsinq.f32.pop %v1119
    %vm1123 = vweird.f32 %v81
    %v1124 = vand.u32 %v1120, 3
    %vm1125 = vcmp.lt.s32.totalorder %v1124, 2
    %vm1126 = vcmp.eq.s32.totalorder %v1124, 0
    %v1127 = vxor.u32 %v1122, 2147483648
    %v1128 = vsel %vm1126, %v1121, %v1127
    %vm1129 = vcmp.eq.s32.totalorder %v1124, 2
    %v1130 = vxor.u32 %v1121, 2147483648
    %v1131 = vsel %vm1129, %v1130, %v1122
    %v1132 = vsel %vm1125, %v1128, %v1131
    %v1133 = vsel %vm1123, nan, %v1132
    %v1134 = vand.u32 2147483647, %v82
    %vm1135 = vcmp.le.f32.partialorder %v1134, 0.7853982
    %vm1136 = vcmp.lt.s32.totalorder %v82, 0
    %v1137 = vand.u32 %v82, 2139095040
    %v1138 = vshrl.u32 %v1137, 23
    %v1139 = vsub.s32 %v1138, 127
    %v1140 = vand.u32 2147483647, %v82
    %v1141 = vand.u32 %v1140, 8388607
    %v1142 = vor.u32 %v1141, 8388608
    %v1143 = vsub.s32 0, %v1142
    %v1144 = vadd.s32 %v1139, 1
    %vm1145 = vcmp.gt.s32.totalorder %v1144, 0
    %v1146 = vsel %vm1145, %v1144, 0
    %v1147 = vshrl.u32 %v1146, 5
    %v1148 = vand.u32 %v1146, 31
    %v1149 = vsub.s32 32, %v1148
    %v1150 = vshrl.u32 683565275, %v1149
    %v1151 = vshll.u32 683565275, %v1148
    %v1152 = vshrl.u32 2475754826, %v1149
    %v1153 = vor.u32 %v1151, %v1152
    %v1154 = vshll.u32 2475754826, %v1148
    %v1155 = vshrl.u32 2131351028, %v1149
    %v1156 = vor.u32 %v1154, %v1155
    %v1157 = vshll.u32 2131351028, %v1148
    %v1158 = vshrl.u32 2102212464, %v1149
    %v1159 = vor.u32 %v1157, %v1158
    %v1160 = vshll.u32 2102212464, %v1148
    %v1161 = vshrl.u32 920167782, %v1149
    %v1162 = vor.u32 %v1160, %v1161
    %v1163 = vshll.u32 920167782, %v1148
    %v1164 = vshrl.u32 1326507024, %v1149
    %v1165 = vor.u32 %v1163, %v1164
    %vm1166 = vcmp.lt.s32.totalorder %v1147, 1
    %vm1167 = vcmp.lt.s32.totalorder %v1147, 2
    %vm1168 = vcmp.lt.s32.totalorder %v1147, 3
    %vm1169 = vcmp.lt.s32.totalorder %v1147, 4
    %v1170 = vsel %vm1166, %v1150, %v1153
    %v1171 = vsel %vm1169, %v1159, 2102212464
    %v1172 = vsel %vm1168, %v1156, %v1171
    %v1173 = vsel %vm1167, %v1170, %v1172
    %v1174 = vsel %vm1166, %v1153, %v1156
    %v1175 = vsel %vm1169, %v1162, 920167782
    %v1176 = vsel %vm1168, %v1159, %v1175
    %v1177 = vsel %vm1167, %v1174, %v1176
    %v1178 = vsel %vm1166, %v1156, %v1159
    %v1179 = vsel %vm1169, %v1165, 1326507024
    %v1180 = vsel %vm1168, %v1162, %v1179
    %v1181 = vsel %vm1167, %v1178, %v1180
    %v1182 = vshll.u32 %v1142, 8
    %v1183 = vmul.u32.u64.compose %v1182, %v1181
    %v1184 = vextract.low.u32 %v1183
    %v1185 = vextract.high.u32 %v1183
    %v1186 = vmul.u32.u64.compose %v1182, %v1177
    %v1187 = vextract.low.u32 %v1186
    %v1188 = vextract.high.u32 %v1186
    %v1189 = vmul.u32 %v1182, %v1173
    %v1190 = vadd.s32 %v1185, %v1187
    %vm1191 = vc.u32 %v1185, %v1187
    %v1192 = vadd.s32 %v1188, 1
    %v1193 = vsel %vm1191, %v1192, %v1188
    %v1194 = vadd.s32 %v1189, %v1193
    %v1195 = vadd.s32 %v1194, 536870912
    %v1196 = vshrl.u32 %v1195, 30
    %v1197 = vshll.u32 %v1196, 30
    %v1198 = vsub.s32 %v1194, %v1197
    %vm1199 = vcmp.lt.s32.totalorder %v1198, 0
    %v1200 = vsub.s32 0, %v1198
    %v1201 = vsel %vm1199, %v1200, %v1198
    %v1202 = vclz %v1201
    %v1203 = vsub.s32 %v1202, 2
    %vm1204 = vcmp.gt.s32.totalorder 0, %v1203
    %v1205 = vsel %vm1204, 0, %v1203
    %v1206 = vsub.s32 32, %v1205
    %v1207 = vshll.u32 %v1198, %v1205
    %v1208 = vshrl.u32 %v1190, %v1206
    %v1209 = vor.u32 %v1207, %v1208
    %v1210 = vsub.s32 4294967266, %v1205
    %v1211 = vadd.s32 %v1210, 127
    %v1212 = vshll.u32 %v1211, 23
    %v1213 = vor.u32 4788187, %v1212
    %v1214 = vand.u32 2147483647, %v1213
    %v1216 = vcvt.s32.f32 %v1209
    %v1217 = vmul.f32 %v1216, %v1214
    %v1218 = vxor.u32 %v1217, 2147483648
    %v1219 = vsel %vm1136, %v1218, %v1217
    %v1220 = vsub.s32 4, %v1196
    %v1221 = vsel %vm1136, %v1220, %v1196
    %v1222 = vsel %vm1135, %v82, %v1219
    %v1223 = vsel %vm1135, 0, %v1221
    %v1224 = vcosq.f32.pop %v1222
    %v1225 = vsinq.f32.pop %v1222
    %vm1226 = vweird.f32 %v82
    %v1227 = vand.u32 %v1223, 3
    %vm1228 = vcmp.lt.s32.totalorder %v1227, 2
    %vm1229 = vcmp.eq.s32.totalorder %v1227, 0
    %v1230 = vxor.u32 %v1225, 2147483648
    %v1231 = vsel %vm1229, %v1224, %v1230
    %vm1232 = vcmp.eq.s32.totalorder %v1227, 2
    %v1233 = vxor.u32 %v1224, 2147483648
    %v1234 = vsel %vm1232, %v1233, %v1225
    %v1235 = vsel %vm1228, %v1231, %v1234
    %v1236 = vsel %vm1226, nan, %v1235
    %v1237 = vand.u32 2147483647, %v83
    %vm1238 = vcmp.le.f32.partialorder %v1237, 0.7853982
    %vm1239 = vcmp.lt.s32.totalorder %v83, 0
    %v1240 = vand.u32 %v83, 2139095040
    %v1241 = vshrl.u32 %v1240, 23
    %v1242 = vsub.s32 %v1241, 127
    %v1243 = vand.u32 2147483647, %v83
    %v1244 = vand.u32 %v1243, 8388607
    %v1245 = vor.u32 %v1244, 8388608
    %v1246 = vsub.s32 0, %v1245
    %v1247 = vadd.s32 %v1242, 1
    %vm1248 = vcmp.gt.s32.totalorder %v1247, 0
    %v1249 = vsel %vm1248, %v1247, 0
    %v1250 = vshrl.u32 %v1249, 5
    %v1251 = vand.u32 %v1249, 31
    %v1252 = vsub.s32 32, %v1251
    %v1253 = vshrl.u32 683565275, %v1252
    %v1254 = vshll.u32 683565275, %v1251
    %v1255 = vshrl.u32 2475754826, %v1252
    %v1256 = vor.u32 %v1254, %v1255
    %v1257 = vshll.u32 2475754826, %v1251
    %v1258 = vshrl.u32 2131351028, %v1252
    %v1259 = vor.u32 %v1257, %v1258
    %v1260 = vshll.u32 2131351028, %v1251
    %v1261 = vshrl.u32 2102212464, %v1252
    %v1262 = vor.u32 %v1260, %v1261
    %v1263 = vshll.u32 2102212464, %v1251
    %v1264 = vshrl.u32 920167782, %v1252
    %v1265 = vor.u32 %v1263, %v1264
    %v1266 = vshll.u32 920167782, %v1251
    %v1267 = vshrl.u32 1326507024, %v1252
    %v1268 = vor.u32 %v1266, %v1267
    %vm1269 = vcmp.lt.s32.totalorder %v1250, 1
    %vm1270 = vcmp.lt.s32.totalorder %v1250, 2
    %vm1271 = vcmp.lt.s32.totalorder %v1250, 3
    %vm1272 = vcmp.lt.s32.totalorder %v1250, 4
    %v1273 = vsel %vm1269, %v1253, %v1256
    %v1274 = vsel %vm1272, %v1262, 2102212464
    %v1275 = vsel %vm1271, %v1259, %v1274
    %v1276 = vsel %vm1270, %v1273, %v1275
    %v1277 = vsel %vm1269, %v1256, %v1259
    %v1278 = vsel %vm1272, %v1265, 920167782
    %v1279 = vsel %vm1271, %v1262, %v1278
    %v1280 = vsel %vm1270, %v1277, %v1279
    %v1281 = vsel %vm1269, %v1259, %v1262
    %v1282 = vsel %vm1272, %v1268, 1326507024
    %v1283 = vsel %vm1271, %v1265, %v1282
    %v1284 = vsel %vm1270, %v1281, %v1283
    %v1285 = vshll.u32 %v1245, 8
    %v1286 = vmul.u32.u64.compose %v1285, %v1284
    %v1287 = vextract.low.u32 %v1286
    %v1288 = vextract.high.u32 %v1286
    %v1289 = vmul.u32.u64.compose %v1285, %v1280
    %v1290 = vextract.low.u32 %v1289
    %v1291 = vextract.high.u32 %v1289
    %v1292 = vmul.u32 %v1285, %v1276
    %v1293 = vadd.s32 %v1288, %v1290
    %vm1294 = vc.u32 %v1288, %v1290
    %v1295 = vadd.s32 %v1291, 1
    %v1296 = vsel %vm1294, %v1295, %v1291
    %v1297 = vadd.s32 %v1292, %v1296
    %v1298 = vadd.s32 %v1297, 536870912
    %v1299 = vshrl.u32 %v1298, 30
    %v1300 = vshll.u32 %v1299, 30
    %v1301 = vsub.s32 %v1297, %v1300
    %vm1302 = vcmp.lt.s32.totalorder %v1301, 0
    %v1303 = vsub.s32 0, %v1301
    %v1304 = vsel %vm1302, %v1303, %v1301
    %v1305 = vclz %v1304
    %v1306 = vsub.s32 %v1305, 2
    %vm1307 = vcmp.gt.s32.totalorder 0, %v1306
    %v1308 = vsel %vm1307, 0, %v1306
    %v1309 = vsub.s32 32, %v1308
    %v1310 = vshll.u32 %v1301, %v1308
    %v1311 = vshrl.u32 %v1293, %v1309
    %v1312 = vor.u32 %v1310, %v1311
    %v1313 = vsub.s32 4294967266, %v1308
    %v1314 = vadd.s32 %v1313, 127
    %v1315 = vshll.u32 %v1314, 23
    %v1316 = vor.u32 4788187, %v1315
    %v1317 = vand.u32 2147483647, %v1316
    %v1319 = vcvt.s32.f32 %v1312
    %v1320 = vmul.f32 %v1319, %v1317
    %v1321 = vxor.u32 %v1320, 2147483648
    %v1322 = vsel %vm1239, %v1321, %v1320
    %v1323 = vsub.s32 4, %v1299
    %v1324 = vsel %vm1239, %v1323, %v1299
    %v1325 = vsel %vm1238, %v83, %v1322
    %v1326 = vsel %vm1238, 0, %v1324
    %v1327 = vcosq.f32.pop %v1325
    %v1328 = vsinq.f32.pop %v1325
    %vm1329 = vweird.f32 %v83
    %v1330 = vand.u32 %v1326, 3
    %vm1331 = vcmp.lt.s32.totalorder %v1330, 2
    %vm1332 = vcmp.eq.s32.totalorder %v1330, 0
    %v1333 = vxor.u32 %v1328, 2147483648
    %v1334 = vsel %vm1332, %v1327, %v1333
    %vm1335 = vcmp.eq.s32.totalorder %v1330, 2
    %v1336 = vxor.u32 %v1327, 2147483648
    %v1337 = vsel %vm1335, %v1336, %v1328
    %v1338 = vsel %vm1331, %v1334, %v1337
    %v1339 = vsel %vm1329, nan, %v1338
    %v1340 = vand.u32 2147483647, %v84
    %vm1341 = vcmp.le.f32.partialorder %v1340, 0.7853982
    %vm1342 = vcmp.lt.s32.totalorder %v84, 0
    %v1343 = vand.u32 %v84, 2139095040
    %v1344 = vshrl.u32 %v1343, 23
    %v1345 = vsub.s32 %v1344, 127
    %v1346 = vand.u32 2147483647, %v84
    %v1347 = vand.u32 %v1346, 8388607
    %v1348 = vor.u32 %v1347, 8388608
    %v1349 = vsub.s32 0, %v1348
    %v1350 = vadd.s32 %v1345, 1
    %vm1351 = vcmp.gt.s32.totalorder %v1350, 0
    %v1352 = vsel %vm1351, %v1350, 0
    %v1353 = vshrl.u32 %v1352, 5
    %v1354 = vand.u32 %v1352, 31
    %v1355 = vsub.s32 32, %v1354
    %v1356 = vshrl.u32 683565275, %v1355
    %v1357 = vshll.u32 683565275, %v1354
    %v1358 = vshrl.u32 2475754826, %v1355
    %v1359 = vor.u32 %v1357, %v1358
    %v1360 = vshll.u32 2475754826, %v1354
    %v1361 = vshrl.u32 2131351028, %v1355
    %v1362 = vor.u32 %v1360, %v1361
    %v1363 = vshll.u32 2131351028, %v1354
    %v1364 = vshrl.u32 2102212464, %v1355
    %v1365 = vor.u32 %v1363, %v1364
    %v1366 = vshll.u32 2102212464, %v1354
    %v1367 = vshrl.u32 920167782, %v1355
    %v1368 = vor.u32 %v1366, %v1367
    %v1369 = vshll.u32 920167782, %v1354
    %v1370 = vshrl.u32 1326507024, %v1355
    %v1371 = vor.u32 %v1369, %v1370
    %vm1372 = vcmp.lt.s32.totalorder %v1353, 1
    %vm1373 = vcmp.lt.s32.totalorder %v1353, 2
    %vm1374 = vcmp.lt.s32.totalorder %v1353, 3
    %vm1375 = vcmp.lt.s32.totalorder %v1353, 4
    %v1376 = vsel %vm1372, %v1356, %v1359
    %v1377 = vsel %vm1375, %v1365, 2102212464
    %v1378 = vsel %vm1374, %v1362, %v1377
    %v1379 = vsel %vm1373, %v1376, %v1378
    %v1380 = vsel %vm1372, %v1359, %v1362
    %v1381 = vsel %vm1375, %v1368, 920167782
    %v1382 = vsel %vm1374, %v1365, %v1381
    %v1383 = vsel %vm1373, %v1380, %v1382
    %v1384 = vsel %vm1372, %v1362, %v1365
    %v1385 = vsel %vm1375, %v1371, 1326507024
    %v1386 = vsel %vm1374, %v1368, %v1385
    %v1387 = vsel %vm1373, %v1384, %v1386
    %v1388 = vshll.u32 %v1348, 8
    %v1389 = vmul.u32.u64.compose %v1388, %v1387
    %v1390 = vextract.low.u32 %v1389
    %v1391 = vextract.high.u32 %v1389
    %v1392 = vmul.u32.u64.compose %v1388, %v1383
    %v1393 = vextract.low.u32 %v1392
    %v1394 = vextract.high.u32 %v1392
    %v1395 = vmul.u32 %v1388, %v1379
    %v1396 = vadd.s32 %v1391, %v1393
    %vm1397 = vc.u32 %v1391, %v1393
    %v1398 = vadd.s32 %v1394, 1
    %v1399 = vsel %vm1397, %v1398, %v1394
    %v1400 = vadd.s32 %v1395, %v1399
    %v1401 = vadd.s32 %v1400, 536870912
    %v1402 = vshrl.u32 %v1401, 30
    %v1403 = vshll.u32 %v1402, 30
    %v1404 = vsub.s32 %v1400, %v1403
    %vm1405 = vcmp.lt.s32.totalorder %v1404, 0
    %v1406 = vsub.s32 0, %v1404
    %v1407 = vsel %vm1405, %v1406, %v1404
    %v1408 = vclz %v1407
    %v1409 = vsub.s32 %v1408, 2
    %vm1410 = vcmp.gt.s32.totalorder 0, %v1409
    %v1411 = vsel %vm1410, 0, %v1409
    %v1412 = vsub.s32 32, %v1411
    %v1413 = vshll.u32 %v1404, %v1411
    %v1414 = vshrl.u32 %v1396, %v1412
    %v1415 = vor.u32 %v1413, %v1414
    %v1416 = vsub.s32 4294967266, %v1411
    %v1417 = vadd.s32 %v1416, 127
    %v1418 = vshll.u32 %v1417, 23
    %v1419 = vor.u32 4788187, %v1418
    %v1420 = vand.u32 2147483647, %v1419
    %v1422 = vcvt.s32.f32 %v1415
    %v1423 = vmul.f32 %v1422, %v1420
    %v1424 = vxor.u32 %v1423, 2147483648
    %v1425 = vsel %vm1342, %v1424, %v1423
    %v1426 = vsub.s32 4, %v1402
    %v1427 = vsel %vm1342, %v1426, %v1402
    %v1428 = vsel %vm1341, %v84, %v1425
    %v1429 = vsel %vm1341, 0, %v1427
    %v1430 = vcosq.f32.pop %v1428
    %v1431 = vsinq.f32.pop %v1428
    %vm1432 = vweird.f32 %v84
    %v1433 = vand.u32 %v1429, 3
    %vm1434 = vcmp.lt.s32.totalorder %v1433, 2
    %vm1435 = vcmp.eq.s32.totalorder %v1433, 0
    %v1436 = vxor.u32 %v1431, 2147483648
    %v1437 = vsel %vm1435, %v1430, %v1436
    %vm1438 = vcmp.eq.s32.totalorder %v1433, 2
    %v1439 = vxor.u32 %v1430, 2147483648
    %v1440 = vsel %vm1438, %v1439, %v1431
    %v1441 = vsel %vm1434, %v1437, %v1440
    %v1442 = vsel %vm1432, nan, %v1441
    %v1443 = vand.u32 2147483647, %v85
    %vm1444 = vcmp.le.f32.partialorder %v1443, 0.7853982
    %vm1445 = vcmp.lt.s32.totalorder %v85, 0
    %v1446 = vand.u32 %v85, 2139095040
    %v1447 = vshrl.u32 %v1446, 23
    %v1448 = vsub.s32 %v1447, 127
    %v1449 = vand.u32 2147483647, %v85
    %v1450 = vand.u32 %v1449, 8388607
    %v1451 = vor.u32 %v1450, 8388608
    %v1452 = vsub.s32 0, %v1451
    %v1453 = vadd.s32 %v1448, 1
    %vm1454 = vcmp.gt.s32.totalorder %v1453, 0
    %v1455 = vsel %vm1454, %v1453, 0
    %v1456 = vshrl.u32 %v1455, 5
    %v1457 = vand.u32 %v1455, 31
    %v1458 = vsub.s32 32, %v1457
    %v1459 = vshrl.u32 683565275, %v1458
    %v1460 = vshll.u32 683565275, %v1457
    %v1461 = vshrl.u32 2475754826, %v1458
    %v1462 = vor.u32 %v1460, %v1461
    %v1463 = vshll.u32 2475754826, %v1457
    %v1464 = vshrl.u32 2131351028, %v1458
    %v1465 = vor.u32 %v1463, %v1464
    %v1466 = vshll.u32 2131351028, %v1457
    %v1467 = vshrl.u32 2102212464, %v1458
    %v1468 = vor.u32 %v1466, %v1467
    %v1469 = vshll.u32 2102212464, %v1457
    %v1470 = vshrl.u32 920167782, %v1458
    %v1471 = vor.u32 %v1469, %v1470
    %v1472 = vshll.u32 920167782, %v1457
    %v1473 = vshrl.u32 1326507024, %v1458
    %v1474 = vor.u32 %v1472, %v1473
    %vm1475 = vcmp.lt.s32.totalorder %v1456, 1
    %vm1476 = vcmp.lt.s32.totalorder %v1456, 2
    %vm1477 = vcmp.lt.s32.totalorder %v1456, 3
    %vm1478 = vcmp.lt.s32.totalorder %v1456, 4
    %v1479 = vsel %vm1475, %v1459, %v1462
    %v1480 = vsel %vm1478, %v1468, 2102212464
    %v1481 = vsel %vm1477, %v1465, %v1480
    %v1482 = vsel %vm1476, %v1479, %v1481
    %v1483 = vsel %vm1475, %v1462, %v1465
    %v1484 = vsel %vm1478, %v1471, 920167782
    %v1485 = vsel %vm1477, %v1468, %v1484
    %v1486 = vsel %vm1476, %v1483, %v1485
    %v1487 = vsel %vm1475, %v1465, %v1468
    %v1488 = vsel %vm1478, %v1474, 1326507024
    %v1489 = vsel %vm1477, %v1471, %v1488
    %v1490 = vsel %vm1476, %v1487, %v1489
    %v1491 = vshll.u32 %v1451, 8
    %v1492 = vmul.u32.u64.compose %v1491, %v1490
    %v1493 = vextract.low.u32 %v1492
    %v1494 = vextract.high.u32 %v1492
    %v1495 = vmul.u32.u64.compose %v1491, %v1486
    %v1496 = vextract.low.u32 %v1495
    %v1497 = vextract.high.u32 %v1495
    %v1498 = vmul.u32 %v1491, %v1482
    %v1499 = vadd.s32 %v1494, %v1496
    %vm1500 = vc.u32 %v1494, %v1496
    %v1501 = vadd.s32 %v1497, 1
    %v1502 = vsel %vm1500, %v1501, %v1497
    %v1503 = vadd.s32 %v1498, %v1502
    %v1504 = vadd.s32 %v1503, 536870912
    %v1505 = vshrl.u32 %v1504, 30
    %v1506 = vshll.u32 %v1505, 30
    %v1507 = vsub.s32 %v1503, %v1506
    %vm1508 = vcmp.lt.s32.totalorder %v1507, 0
    %v1509 = vsub.s32 0, %v1507
    %v1510 = vsel %vm1508, %v1509, %v1507
    %v1511 = vclz %v1510
    %v1512 = vsub.s32 %v1511, 2
    %vm1513 = vcmp.gt.s32.totalorder 0, %v1512
    %v1514 = vsel %vm1513, 0, %v1512
    %v1515 = vsub.s32 32, %v1514
    %v1516 = vshll.u32 %v1507, %v1514
    %v1517 = vshrl.u32 %v1499, %v1515
    %v1518 = vor.u32 %v1516, %v1517
    %v1519 = vsub.s32 4294967266, %v1514
    %v1520 = vadd.s32 %v1519, 127
    %v1521 = vshll.u32 %v1520, 23
    %v1522 = vor.u32 4788187, %v1521
    %v1523 = vand.u32 2147483647, %v1522
    %v1525 = vcvt.s32.f32 %v1518
    %v1526 = vmul.f32 %v1525, %v1523
    %v1527 = vxor.u32 %v1526, 2147483648
    %v1528 = vsel %vm1445, %v1527, %v1526
    %v1529 = vsub.s32 4, %v1505
    %v1530 = vsel %vm1445, %v1529, %v1505
    %v1531 = vsel %vm1444, %v85, %v1528
    %v1532 = vsel %vm1444, 0, %v1530
    %v1533 = vcosq.f32.pop %v1531
    %v1534 = vsinq.f32.pop %v1531
    %vm1535 = vweird.f32 %v85
    %v1536 = vand.u32 %v1532, 3
    %vm1537 = vcmp.lt.s32.totalorder %v1536, 2
    %vm1538 = vcmp.eq.s32.totalorder %v1536, 0
    %v1539 = vxor.u32 %v1534, 2147483648
    %v1540 = vsel %vm1538, %v1533, %v1539
    %vm1541 = vcmp.eq.s32.totalorder %v1536, 2
    %v1542 = vxor.u32 %v1533, 2147483648
    %v1543 = vsel %vm1541, %v1542, %v1534
    %v1544 = vsel %vm1537, %v1540, %v1543
    %v1545 = vsel %vm1535, nan, %v1544
    %v1546 = vand.u32 2147483647, %v86
    %vm1547 = vcmp.le.f32.partialorder %v1546, 0.7853982
    %vm1548 = vcmp.lt.s32.totalorder %v86, 0
    %v1549 = vand.u32 %v86, 2139095040
    %v1550 = vshrl.u32 %v1549, 23
    %v1551 = vsub.s32 %v1550, 127
    %v1552 = vand.u32 2147483647, %v86
    %v1553 = vand.u32 %v1552, 8388607
    %v1554 = vor.u32 %v1553, 8388608
    %v1555 = vsub.s32 0, %v1554
    %v1556 = vadd.s32 %v1551, 1
    %vm1557 = vcmp.gt.s32.totalorder %v1556, 0
    %v1558 = vsel %vm1557, %v1556, 0
    %v1559 = vshrl.u32 %v1558, 5
    %v1560 = vand.u32 %v1558, 31
    %v1561 = vsub.s32 32, %v1560
    %v1562 = vshrl.u32 683565275, %v1561
    %v1563 = vshll.u32 683565275, %v1560
    %v1564 = vshrl.u32 2475754826, %v1561
    %v1565 = vor.u32 %v1563, %v1564
    %v1566 = vshll.u32 2475754826, %v1560
    %v1567 = vshrl.u32 2131351028, %v1561
    %v1568 = vor.u32 %v1566, %v1567
    %v1569 = vshll.u32 2131351028, %v1560
    %v1570 = vshrl.u32 2102212464, %v1561
    %v1571 = vor.u32 %v1569, %v1570
    %v1572 = vshll.u32 2102212464, %v1560
    %v1573 = vshrl.u32 920167782, %v1561
    %v1574 = vor.u32 %v1572, %v1573
    %v1575 = vshll.u32 920167782, %v1560
    %v1576 = vshrl.u32 1326507024, %v1561
    %v1577 = vor.u32 %v1575, %v1576
    %vm1578 = vcmp.lt.s32.totalorder %v1559, 1
    %vm1579 = vcmp.lt.s32.totalorder %v1559, 2
    %vm1580 = vcmp.lt.s32.totalorder %v1559, 3
    %vm1581 = vcmp.lt.s32.totalorder %v1559, 4
    %v1582 = vsel %vm1578, %v1562, %v1565
    %v1583 = vsel %vm1581, %v1571, 2102212464
    %v1584 = vsel %vm1580, %v1568, %v1583
    %v1585 = vsel %vm1579, %v1582, %v1584
    %v1586 = vsel %vm1578, %v1565, %v1568
    %v1587 = vsel %vm1581, %v1574, 920167782
    %v1588 = vsel %vm1580, %v1571, %v1587
    %v1589 = vsel %vm1579, %v1586, %v1588
    %v1590 = vsel %vm1578, %v1568, %v1571
    %v1591 = vsel %vm1581, %v1577, 1326507024
    %v1592 = vsel %vm1580, %v1574, %v1591
    %v1593 = vsel %vm1579, %v1590, %v1592
    %v1594 = vshll.u32 %v1554, 8
    %v1595 = vmul.u32.u64.compose %v1594, %v1593
    %v1596 = vextract.low.u32 %v1595
    %v1597 = vextract.high.u32 %v1595
    %v1598 = vmul.u32.u64.compose %v1594, %v1589
    %v1599 = vextract.low.u32 %v1598
    %v1600 = vextract.high.u32 %v1598
    %v1601 = vmul.u32 %v1594, %v1585
    %v1602 = vadd.s32 %v1597, %v1599
    %vm1603 = vc.u32 %v1597, %v1599
    %v1604 = vadd.s32 %v1600, 1
    %v1605 = vsel %vm1603, %v1604, %v1600
    %v1606 = vadd.s32 %v1601, %v1605
    %v1607 = vadd.s32 %v1606, 536870912
    %v1608 = vshrl.u32 %v1607, 30
    %v1609 = vshll.u32 %v1608, 30
    %v1610 = vsub.s32 %v1606, %v1609
    %vm1611 = vcmp.lt.s32.totalorder %v1610, 0
    %v1612 = vsub.s32 0, %v1610
    %v1613 = vsel %vm1611, %v1612, %v1610
    %v1614 = vclz %v1613
    %v1615 = vsub.s32 %v1614, 2
    %vm1616 = vcmp.gt.s32.totalorder 0, %v1615
    %v1617 = vsel %vm1616, 0, %v1615
    %v1618 = vsub.s32 32, %v1617
    %v1619 = vshll.u32 %v1610, %v1617
    %v1620 = vshrl.u32 %v1602, %v1618
    %v1621 = vor.u32 %v1619, %v1620
    %v1622 = vsub.s32 4294967266, %v1617
    %v1623 = vadd.s32 %v1622, 127
    %v1624 = vshll.u32 %v1623, 23
    %v1625 = vor.u32 4788187, %v1624
    %v1626 = vand.u32 2147483647, %v1625
    %v1628 = vcvt.s32.f32 %v1621
    %v1629 = vmul.f32 %v1628, %v1626
    %v1630 = vxor.u32 %v1629, 2147483648
    %v1631 = vsel %vm1548, %v1630, %v1629
    %v1632 = vsub.s32 4, %v1608
    %v1633 = vsel %vm1548, %v1632, %v1608
    %v1634 = vsel %vm1547, %v86, %v1631
    %v1635 = vsel %vm1547, 0, %v1633
    %v1636 = vcosq.f32.pop %v1634
    %v1637 = vsinq.f32.pop %v1634
    %vm1638 = vweird.f32 %v86
    %v1639 = vand.u32 %v1635, 3
    %vm1640 = vcmp.lt.s32.totalorder %v1639, 2
    %vm1641 = vcmp.eq.s32.totalorder %v1639, 0
    %v1642 = vxor.u32 %v1637, 2147483648
    %v1643 = vsel %vm1641, %v1636, %v1642
    %vm1644 = vcmp.eq.s32.totalorder %v1639, 2
    %v1645 = vxor.u32 %v1636, 2147483648
    %v1646 = vsel %vm1644, %v1645, %v1637
    %v1647 = vsel %vm1640, %v1643, %v1646
    %v1648 = vsel %vm1638, nan, %v1647
    %v1649 = vand.u32 2147483647, %v87
    %vm1650 = vcmp.le.f32.partialorder %v1649, 0.7853982
    %vm1651 = vcmp.lt.s32.totalorder %v87, 0
    %v1652 = vand.u32 %v87, 2139095040
    %v1653 = vshrl.u32 %v1652, 23
    %v1654 = vsub.s32 %v1653, 127
    %v1655 = vand.u32 2147483647, %v87
    %v1656 = vand.u32 %v1655, 8388607
    %v1657 = vor.u32 %v1656, 8388608
    %v1658 = vsub.s32 0, %v1657
    %v1659 = vadd.s32 %v1654, 1
    %vm1660 = vcmp.gt.s32.totalorder %v1659, 0
    %v1661 = vsel %vm1660, %v1659, 0
    %v1662 = vshrl.u32 %v1661, 5
    %v1663 = vand.u32 %v1661, 31
    %v1664 = vsub.s32 32, %v1663
    %v1665 = vshrl.u32 683565275, %v1664
    %v1666 = vshll.u32 683565275, %v1663
    %v1667 = vshrl.u32 2475754826, %v1664
    %v1668 = vor.u32 %v1666, %v1667
    %v1669 = vshll.u32 2475754826, %v1663
    %v1670 = vshrl.u32 2131351028, %v1664
    %v1671 = vor.u32 %v1669, %v1670
    %v1672 = vshll.u32 2131351028, %v1663
    %v1673 = vshrl.u32 2102212464, %v1664
    %v1674 = vor.u32 %v1672, %v1673
    %v1675 = vshll.u32 2102212464, %v1663
    %v1676 = vshrl.u32 920167782, %v1664
    %v1677 = vor.u32 %v1675, %v1676
    %v1678 = vshll.u32 920167782, %v1663
    %v1679 = vshrl.u32 1326507024, %v1664
    %v1680 = vor.u32 %v1678, %v1679
    %vm1681 = vcmp.lt.s32.totalorder %v1662, 1
    %vm1682 = vcmp.lt.s32.totalorder %v1662, 2
    %vm1683 = vcmp.lt.s32.totalorder %v1662, 3
    %vm1684 = vcmp.lt.s32.totalorder %v1662, 4
    %v1685 = vsel %vm1681, %v1665, %v1668
    %v1686 = vsel %vm1684, %v1674, 2102212464
    %v1687 = vsel %vm1683, %v1671, %v1686
    %v1688 = vsel %vm1682, %v1685, %v1687
    %v1689 = vsel %vm1681, %v1668, %v1671
    %v1690 = vsel %vm1684, %v1677, 920167782
    %v1691 = vsel %vm1683, %v1674, %v1690
    %v1692 = vsel %vm1682, %v1689, %v1691
    %v1693 = vsel %vm1681, %v1671, %v1674
    %v1694 = vsel %vm1684, %v1680, 1326507024
    %v1695 = vsel %vm1683, %v1677, %v1694
    %v1696 = vsel %vm1682, %v1693, %v1695
    %v1697 = vshll.u32 %v1657, 8
    %v1698 = vmul.u32.u64.compose %v1697, %v1696
    %v1699 = vextract.low.u32 %v1698
    %v1700 = vextract.high.u32 %v1698
    %v1701 = vmul.u32.u64.compose %v1697, %v1692
    %v1702 = vextract.low.u32 %v1701
    %v1703 = vextract.high.u32 %v1701
    %v1704 = vmul.u32 %v1697, %v1688
    %v1705 = vadd.s32 %v1700, %v1702
    %vm1706 = vc.u32 %v1700, %v1702
    %v1707 = vadd.s32 %v1703, 1
    %v1708 = vsel %vm1706, %v1707, %v1703
    %v1709 = vadd.s32 %v1704, %v1708
    %v1710 = vadd.s32 %v1709, 536870912
    %v1711 = vshrl.u32 %v1710, 30
    %v1712 = vshll.u32 %v1711, 30
    %v1713 = vsub.s32 %v1709, %v1712
    %vm1714 = vcmp.lt.s32.totalorder %v1713, 0
    %v1715 = vsub.s32 0, %v1713
    %v1716 = vsel %vm1714, %v1715, %v1713
    %v1717 = vclz %v1716
    %v1718 = vsub.s32 %v1717, 2
    %vm1719 = vcmp.gt.s32.totalorder 0, %v1718
    %v1720 = vsel %vm1719, 0, %v1718
    %v1721 = vsub.s32 32, %v1720
    %v1722 = vshll.u32 %v1713, %v1720
    %v1723 = vshrl.u32 %v1705, %v1721
    %v1724 = vor.u32 %v1722, %v1723
    %v1725 = vsub.s32 4294967266, %v1720
    %v1726 = vadd.s32 %v1725, 127
    %v1727 = vshll.u32 %v1726, 23
    %v1728 = vor.u32 4788187, %v1727
    %v1729 = vand.u32 2147483647, %v1728
    %v1731 = vcvt.s32.f32 %v1724
    %v1732 = vmul.f32 %v1731, %v1729
    %v1733 = vxor.u32 %v1732, 2147483648
    %v1734 = vsel %vm1651, %v1733, %v1732
    %v1735 = vsub.s32 4, %v1711
    %v1736 = vsel %vm1651, %v1735, %v1711
    %v1737 = vsel %vm1650, %v87, %v1734
    %v1738 = vsel %vm1650, 0, %v1736
    %v1739 = vcosq.f32.pop %v1737
    %v1740 = vsinq.f32.pop %v1737
    %vm1741 = vweird.f32 %v87
    %v1742 = vand.u32 %v1738, 3
    %vm1743 = vcmp.lt.s32.totalorder %v1742, 2
    %vm1744 = vcmp.eq.s32.totalorder %v1742, 0
    %v1745 = vxor.u32 %v1740, 2147483648
    %v1746 = vsel %vm1744, %v1739, %v1745
    %vm1747 = vcmp.eq.s32.totalorder %v1742, 2
    %v1748 = vxor.u32 %v1739, 2147483648
    %v1749 = vsel %vm1747, %v1748, %v1740
    %v1750 = vsel %vm1743, %v1746, %v1749
    %v1751 = vsel %vm1741, nan, %v1750
    %v1752 = vmul.f32 %v199, %v88
    %v1753 = vmul.f32 %v303, %v89
    %v1754 = vmul.f32 %v407, %v90
    %v1755 = vmul.f32 %v511, %v91
    %v1756 = vmul.f32 %v615, %v92
    %v1757 = vmul.f32 %v719, %v93
    %v1758 = vmul.f32 %v823, %v94
    %v1759 = vmul.f32 %v927, %v95
    %v1760 = vsub.f32 %v1752, %v1030
    %v1761 = vsub.f32 %v1753, %v1133
    %v1762 = vsub.f32 %v1754, %v1236
    %v1763 = vsub.f32 %v1755, %v1339
    %v1764 = vsub.f32 %v1756, %v1442
    %v1765 = vsub.f32 %v1757, %v1545
    %v1766 = vsub.f32 %v1758, %v1648
    %v1767 = vsub.f32 %v1759, %v1751
    %v1768 = vmul.f32 %v1760, %v88
    %v1769 = vmul.f32 %v1761, %v89
    %v1770 = vmul.f32 %v1762, %v90
    %v1771 = vmul.f32 %v1763, %v91
    %v1772 = vmul.f32 %v1764, %v92
    %v1773 = vmul.f32 %v1765, %v93
    %v1774 = vmul.f32 %v1766, %v94
    %v1775 = vmul.f32 %v1767, %v95
    %vm1776 = vcmp.ge.s32.totalorder %v47, 4
    %vm1777 = vcmp.ge.s32.totalorder %v48, 4
    %v1778 = vsel %vm1776, 1, 0
    %v1779 = vsel %vm1777, 1, 0
    %vm1780 = vcmp.eq.s32.totalorder %v1778, 1
    %vm1781 = vcmp.eq.s32.totalorder %v1779, 1
    %v1782 = vsel %vm1780, %v1768, %v1752
    %v1783 = vsel %vm1780, %v1769, %v1753
    %v1784 = vsel %vm1780, %v1770, %v1754
    %v1785 = vsel %vm1780, %v1771, %v1755
    %v1786 = vsel %vm1781, %v1772, %v1756
    %v1787 = vsel %vm1781, %v1773, %v1757
    %v1788 = vsel %vm1781, %v1774, %v1758
    %v1789 = vsel %vm1781, %v1775, %v1759
    %v1790 = vmul.f32 %v88, 3.0
    %v1791 = vmul.f32 %v89, 3.0
    %v1792 = vmul.f32 %v90, 3.0
    %v1793 = vmul.f32 %v91, 3.0
    %v1794 = vmul.f32 %v92, 3.0
    %v1795 = vmul.f32 %v93, 3.0
    %v1796 = vmul.f32 %v94, 3.0
    %v1797 = vmul.f32 %v95, 3.0
    %v1798 = vmul.f32 %v1790, %v1768
    %v1799 = vmul.f32 %v1791, %v1769
    %v1800 = vmul.f32 %v1792, %v1770
    %v1801 = vmul.f32 %v1793, %v1771
    %v1802 = vmul.f32 %v1794, %v1772
    %v1803 = vmul.f32 %v1795, %v1773
    %v1804 = vmul.f32 %v1796, %v1774
    %v1805 = vmul.f32 %v1797, %v1775
    %v1806 = vsub.f32 %v1798, %v1752
    %v1807 = vsub.f32 %v1799, %v1753
    %v1808 = vsub.f32 %v1800, %v1754
    %v1809 = vsub.f32 %v1801, %v1755
    %v1810 = vsub.f32 %v1802, %v1756
    %v1811 = vsub.f32 %v1803, %v1757
    %v1812 = vsub.f32 %v1804, %v1758
    %v1813 = vsub.f32 %v1805, %v1759
    %vm1814 = vcmp.ge.s32.totalorder %v47, 8
    %vm1815 = vcmp.ge.s32.totalorder %v48, 8
    %v1816 = vsel %vm1814, 1, 0
    %v1817 = vsel %vm1815, 1, 0
    %vm1818 = vcmp.eq.s32.totalorder %v1816, 1
    %vm1819 = vcmp.eq.s32.totalorder %v1817, 1
    %v1820 = vsel %vm1818, %v1806, %v1782
    %v1821 = vsel %vm1818, %v1807, %v1783
    %v1822 = vsel %vm1818, %v1808, %v1784
    %v1823 = vsel %vm1818, %v1809, %v1785
    %v1824 = vsel %vm1819, %v1810, %v1786
    %v1825 = vsel %vm1819, %v1811, %v1787
    %v1826 = vsel %vm1819, %v1812, %v1788
    %v1827 = vsel %vm1819, %v1813, %v1789
    %v1828 = vand.u32 2147483647, %v22
    %vm1829 = vcmp.le.f32.partialorder %v1828, 0.7853982
    %vm1830 = vcmp.lt.s32.totalorder %v22, 0
    %v1831 = vand.u32 %v22, 2139095040
    %v1832 = vshrl.u32 %v1831, 23
    %v1833 = vsub.s32 %v1832, 127
    %v1834 = vand.u32 2147483647, %v22
    %v1835 = vand.u32 %v1834, 8388607
    %v1836 = vor.u32 %v1835, 8388608
    %v1837 = vsub.s32 0, %v1836
    %v1838 = vadd.s32 %v1833, 1
    %vm1839 = vcmp.gt.s32.totalorder %v1838, 0
    %v1840 = vsel %vm1839, %v1838, 0
    %v1841 = vshrl.u32 %v1840, 5
    %v1842 = vand.u32 %v1840, 31
    %v1843 = vsub.s32 32, %v1842
    %v1844 = vshrl.u32 683565275, %v1843
    %v1845 = vshll.u32 683565275, %v1842
    %v1846 = vshrl.u32 2475754826, %v1843
    %v1847 = vor.u32 %v1845, %v1846
    %v1848 = vshll.u32 2475754826, %v1842
    %v1849 = vshrl.u32 2131351028, %v1843
    %v1850 = vor.u32 %v1848, %v1849
    %v1851 = vshll.u32 2131351028, %v1842
    %v1852 = vshrl.u32 2102212464, %v1843
    %v1853 = vor.u32 %v1851, %v1852
    %v1854 = vshll.u32 2102212464, %v1842
    %v1855 = vshrl.u32 920167782, %v1843
    %v1856 = vor.u32 %v1854, %v1855
    %v1857 = vshll.u32 920167782, %v1842
    %v1858 = vshrl.u32 1326507024, %v1843
    %v1859 = vor.u32 %v1857, %v1858
    %vm1860 = vcmp.lt.s32.totalorder %v1841, 1
    %vm1861 = vcmp.lt.s32.totalorder %v1841, 2
    %vm1862 = vcmp.lt.s32.totalorder %v1841, 3
    %vm1863 = vcmp.lt.s32.totalorder %v1841, 4
    %v1864 = vsel %vm1860, %v1844, %v1847
    %v1865 = vsel %vm1863, %v1853, 2102212464
    %v1866 = vsel %vm1862, %v1850, %v1865
    %v1867 = vsel %vm1861, %v1864, %v1866
    %v1868 = vsel %vm1860, %v1847, %v1850
    %v1869 = vsel %vm1863, %v1856, 920167782
    %v1870 = vsel %vm1862, %v1853, %v1869
    %v1871 = vsel %vm1861, %v1868, %v1870
    %v1872 = vsel %vm1860, %v1850, %v1853
    %v1873 = vsel %vm1863, %v1859, 1326507024
    %v1874 = vsel %vm1862, %v1856, %v1873
    %v1875 = vsel %vm1861, %v1872, %v1874
    %v1876 = vshll.u32 %v1836, 8
    %v1877 = vmul.u32.u64.compose %v1876, %v1875
    %v1878 = vextract.low.u32 %v1877
    %v1879 = vextract.high.u32 %v1877
    %v1880 = vmul.u32.u64.compose %v1876, %v1871
    %v1881 = vextract.low.u32 %v1880
    %v1882 = vextract.high.u32 %v1880
    %v1883 = vmul.u32 %v1876, %v1867
    %v1884 = vadd.s32 %v1879, %v1881
    %vm1885 = vc.u32 %v1879, %v1881
    %v1886 = vadd.s32 %v1882, 1
    %v1887 = vsel %vm1885, %v1886, %v1882
    %v1888 = vadd.s32 %v1883, %v1887
    %v1889 = vadd.s32 %v1888, 536870912
    %v1890 = vshrl.u32 %v1889, 30
    %v1891 = vshll.u32 %v1890, 30
    %v1892 = vsub.s32 %v1888, %v1891
    %vm1893 = vcmp.lt.s32.totalorder %v1892, 0
    %v1894 = vsub.s32 0, %v1892
    %v1895 = vsel %vm1893, %v1894, %v1892
    %v1896 = vclz %v1895
    %v1897 = vsub.s32 %v1896, 2
    %vm1898 = vcmp.gt.s32.totalorder 0, %v1897
    %v1899 = vsel %vm1898, 0, %v1897
    %v1900 = vsub.s32 32, %v1899
    %v1901 = vshll.u32 %v1892, %v1899
    %v1902 = vshrl.u32 %v1884, %v1900
    %v1903 = vor.u32 %v1901, %v1902
    %v1904 = vsub.s32 4294967266, %v1899
    %v1905 = vadd.s32 %v1904, 127
    %v1906 = vshll.u32 %v1905, 23
    %v1907 = vor.u32 4788187, %v1906
    %v1908 = vand.u32 2147483647, %v1907
    %v1910 = vcvt.s32.f32 %v1903
    %v1911 = vmul.f32 %v1910, %v1908
    %v1912 = vxor.u32 %v1911, 2147483648
    %v1913 = vsel %vm1830, %v1912, %v1911
    %v1914 = vsub.s32 4, %v1890
    %v1915 = vsel %vm1830, %v1914, %v1890
    %v1916 = vsel %vm1829, %v22, %v1913
    %v1917 = vsel %vm1829, 0, %v1915
    %v1918 = vcosq.f32.pop %v1916
    %v1919 = vsinq.f32.pop %v1916
    %vm1920 = vweird.f32 %v22
    %v1921 = vand.u32 %v1917, 3
    %vm1922 = vcmp.lt.s32.totalorder %v1921, 2
    %vm1923 = vcmp.eq.s32.totalorder %v1921, 0
    %v1924 = vxor.u32 %v1919, 2147483648
    %v1925 = vsel %vm1923, %v1918, %v1924
    %vm1926 = vcmp.eq.s32.totalorder %v1921, 2
    %v1927 = vxor.u32 %v1918, 2147483648
    %v1928 = vsel %vm1926, %v1927, %v1919
    %v1929 = vsel %vm1922, %v1925, %v1928
    %v1930 = vsel %vm1920, nan, %v1929
    %v1932 = vlaneseq
    %v1933 = vshrl.u32 %v1932, 7
    %v1934 = vsub.s32 0, %v1933
    %v1935 = vrot.slane %v1930, %v1934
    %v1936 = vlaneseq
    %v1937 = vshrl.u32 %v1936, 7
    %v1938 = vsub.s32 1, %v1937
    %v1939 = vrot.slane %v1930, %v1938
    %v1940 = vlaneseq
    %v1941 = vshrl.u32 %v1940, 7
    %v1942 = vsub.s32 2, %v1941
    %v1943 = vrot.slane %v1930, %v1942
    %v1944 = vlaneseq
    %v1945 = vshrl.u32 %v1944, 7
    %v1946 = vsub.s32 3, %v1945
    %v1947 = vrot.slane %v1930, %v1946
    %v1952 = vsel %vm1780, %v1935, 1.0
    %v1953 = vsel %vm1780, %v1939, 1.0
    %v1954 = vsel %vm1780, %v1943, 1.0
    %v1955 = vsel %vm1780, %v1947, 1.0
    %v1956 = vsel %vm1781, %v1935, 1.0
    %v1957 = vsel %vm1781, %v1939, 1.0
    %v1958 = vsel %vm1781, %v1943, 1.0
    %v1959 = vsel %vm1781, %v1947, 1.0
    %v1960 = vmul.f32 %v1930, 3.0
    %v1961 = vmul.f32 %v1960, %v1930
    %v1962 = vsub.f32 %v1961, 1.0
    %v1963 = vmul.f32 %v1962, 0.5
    %v1965 = vlaneseq
    %v1966 = vshrl.u32 %v1965, 7
    %v1967 = vsub.s32 0, %v1966
    %v1968 = vrot.slane %v1963, %v1967
    %v1969 = vlaneseq
    %v1970 = vshrl.u32 %v1969, 7
    %v1971 = vsub.s32 1, %v1970
    %v1972 = vrot.slane %v1963, %v1971
    %v1973 = vlaneseq
    %v1974 = vshrl.u32 %v1973, 7
    %v1975 = vsub.s32 2, %v1974
    %v1976 = vrot.slane %v1963, %v1975
    %v1977 = vlaneseq
    %v1978 = vshrl.u32 %v1977, 7
    %v1979 = vsub.s32 3, %v1978
    %v1980 = vrot.slane %v1963, %v1979
    %v1985 = vsel %vm1818, %v1968, %v1952
    %v1986 = vsel %vm1818, %v1972, %v1953
    %v1987 = vsel %vm1818, %v1976, %v1954
    %v1988 = vsel %vm1818, %v1980, %v1955
    %v1989 = vsel %vm1819, %v1968, %v1956
    %v1990 = vsel %vm1819, %v1972, %v1957
    %v1991 = vsel %vm1819, %v1976, %v1958
    %v1992 = vsel %vm1819, %v1980, %v1959
    %1994 = vset.pattern.permute.xlu0 0
    %1995 = vperm.xlu0 %1994, %v25
    %v1996 = vpop.permute.xlu0 %1995
    %1999 = vset.pattern.permute.xlu0 0
    %2000 = vperm.xlu0 %1999, %v26
    %v2001 = vpop.permute.xlu0 %2000
    %v2003 = vmul.f32 %v1996, %v1820
    %v2004 = vmul.f32 %v1996, %v1821
    %v2005 = vmul.f32 %v1996, %v1822
    %v2006 = vmul.f32 %v1996, %v1823
    %v2007 = vmul.f32 %v2001, %v1824
    %v2008 = vmul.f32 %v2001, %v1825
    %v2009 = vmul.f32 %v2001, %v1826
    %v2010 = vmul.f32 %v2001, %v1827
    %v2012 = vlaneseq
    %v2013 = vshrl.u32 %v2012, 7
    %v2014 = vsub.s32 0, %v2013
    %v2015 = vrot.slane %v45, %v2014
    %v2016 = vlaneseq
    %v2017 = vshrl.u32 %v2016, 7
    %v2018 = vsub.s32 1, %v2017
    %v2019 = vrot.slane %v45, %v2018
    %v2020 = vlaneseq
    %v2021 = vshrl.u32 %v2020, 7
    %v2022 = vsub.s32 2, %v2021
    %v2023 = vrot.slane %v45, %v2022
    %v2024 = vlaneseq
    %v2025 = vshrl.u32 %v2024, 7
    %v2026 = vsub.s32 3, %v2025
    %v2027 = vrot.slane %v45, %v2026
    %v2032 = vmul.f32 %v2015, %v2003
    %v2033 = vmul.f32 %v2019, %v2004
    %v2034 = vmul.f32 %v2023, %v2005
    %v2035 = vmul.f32 %v2027, %v2006
    %v2036 = vmul.f32 %v2015, %v2007
    %v2037 = vmul.f32 %v2019, %v2008
    %v2038 = vmul.f32 %v2023, %v2009
    %v2039 = vmul.f32 %v2027, %v2010
    %2041 = vset.pattern.permute.xlu0 0
    %2042 = vperm.xlu0 %2041, %v27
    %v2043 = vpop.permute.xlu0 %2042
    %2046 = vset.pattern.permute.xlu0 0
    %2047 = vperm.xlu0 %2046, %v28
    %v2048 = vpop.permute.xlu0 %2047
    %v2050 = vmul.f32 %v2043, %v1985
    %v2051 = vmul.f32 %v2043, %v1986
    %v2052 = vmul.f32 %v2043, %v1987
    %v2053 = vmul.f32 %v2043, %v1988
    %v2054 = vmul.f32 %v2048, %v1989
    %v2055 = vmul.f32 %v2048, %v1990
    %v2056 = vmul.f32 %v2048, %v1991
    %v2057 = vmul.f32 %v2048, %v1992
    %v2058 = vmul.f32 %v2032, %v2050
    %v2059 = vmul.f32 %v2033, %v2051
    %v2060 = vmul.f32 %v2034, %v2052
    %v2061 = vmul.f32 %v2035, %v2053
    %v2062 = vmul.f32 %v2036, %v2054
    %v2063 = vmul.f32 %v2037, %v2055
    %v2064 = vmul.f32 %v2038, %v2056
    %v2065 = vmul.f32 %v2039, %v2057
    %2066 = vst [vmem:[#allocation2] sm:$0xff] %v2058
    %2067 = vst [vmem:[#allocation2 + $0x8] sm:$0xff] %v2059
    %2068 = vst [vmem:[#allocation2 + $0x10] sm:$0xff] %v2060
    %2069 = vst [vmem:[#allocation2 + $0x18] sm:$0xff] %v2061
    %2070 = vst [vmem:[#allocation2 + $0x20] sm:$0xf] %v2062
    %2071 = vst [vmem:[#allocation2 + $0x28] sm:$0xf] %v2063
    %2072 = vst [vmem:[#allocation2 + $0x30] sm:$0xf] %v2064
    %2073 = vst [vmem:[#allocation2 + $0x38] sm:$0xf] %v2065
    // Predicated region
    $region22: #{tpu_custom_call.1} parent=1 // pred_check
      _
    $region23: #{tpu_custom_call.1} parent=1 // pred_check_branch
      %2075 = sbr.rel (0) target = $region25
    $region24: #{tpu_custom_call.1} parent=1 // pred_region
      %s2077 = ssub.s32 1024, 1024
      %2078 = vsyncadd [#allocation3], %s2077
      %s2079 = sshll.u32 [#allocation2], 4
      %s2080 = int_to_ptr.vmem [resolvable:$true] %s2079
      %2085 = dma.vmem_to_hbm [thread:$0]  %s2080, 1024, %s5, [#allocation3], 512, 512, 32
    $region25: #{tpu_custom_call.1} parent=1 // pred_fallthru
      _
    // Predicated region
    $region26: #{tpu_custom_call.1} parent=1 // pred_check
      _
    $region27: #{tpu_custom_call.1} parent=1 // pred_check_branch
      %2087 = sbr.rel (0) target = $region29
    $region28: #{tpu_custom_call.1} parent=1 // pred_region
      %2088 = dma.done [#allocation3], 1024
    $region29: #{tpu_custom_call.1} parent=1 // pred_fallthru
      _
    %2089 = vsyncpa [#allocation3], 1

</llo_original>
